<compile_context>
chip_gen: v6e
topology: v6e:2x2x1
jax: 0.10.0
libtpu: 0.0.40
codegen_flags: <defaults>
</compile_context>

<pallas_src>
import numpy as np
import jax
import jax.numpy as jnp
from jax import lax
from jax.experimental import pallas as pl
from jax.experimental.pallas import tpu as pltpu  # noqa: F401  (TPU backend assumed)

# ---------------- model hyper-parameters (small) ----------------
NUM_FEATURES = 32          # node feature dim (num_features)
HIDDEN = 64                # hidden_size
NUM_RELATIONS = 8
NUM_BASES = 30             # hard-coded num_bases=30 in the module
NUM_CLASSES = 7
EMO_DIM = NUM_FEATURES + HIDDEN   # dim of torch.cat([x, out], -1)


def _full_spec(shape):
    # whole-array block (block_shape == full dims satisfies the (8,128) rule), grid = ()
    return pl.BlockSpec(shape, lambda *_: (0,) * len(shape))


# ---------------- Pallas kernels ----------------

def _graph_net_kernel(x_ref, a_rel_ref, a_gc_ref,
                      w_rel_ref, w_root_ref, b_rgcn_ref,
                      w_gc_nb_ref, w_gc_root_ref, b_gc_ref,
                      w_lin_x_ref, w_lin_h_ref, b_lin_ref,
                      w_smax_ref, b_smax_ref,
                      gcn_ref, logprob_ref):
    """Fused RGCNConv + GraphConv + (nodal_attn=False) classification head."""
    x = x_ref[...]                                                      # (Np, F)

    # --- RGCNConv with basis decomposition.  Per-relation weights are pre-folded
    #     (W_r = sum_b att[r,b]*basis[b]); edge_norm and the mean aggregation are folded
    #     into the dense adjacency a_rel[r, i, j].
    h1 = jnp.dot(x, w_root_ref[...], preferred_element_type=jnp.float32) + b_rgcn_ref[...]
    for r in range(NUM_RELATIONS):                                      # static unroll, R small
        xw = jnp.dot(x, w_rel_ref[r], preferred_element_type=jnp.float32)          # (Np, H)
        h1 = h1 + jnp.dot(a_rel_ref[r], xw, preferred_element_type=jnp.float32)    # (Np, H)

    # --- GraphConv: add-aggregated neighbour transform + root linear ---
    h1w = jnp.dot(h1, w_gc_nb_ref[...], preferred_element_type=jnp.float32)
    h2 = (jnp.dot(a_gc_ref[...], h1w, preferred_element_type=jnp.float32)
          + jnp.dot(h1, w_gc_root_ref[...], preferred_element_type=jnp.float32)
          + b_gc_ref[...])
    gcn_ref[...] = h2

    # --- classify (nodal_attn=False): relu(linear([x, h2])) -> smax_fc -> log_softmax(dim=1)
    #     The concat is avoided by splitting the linear weight into its x / gcn blocks.
    hid = jnp.maximum(
        jnp.dot(x, w_lin_x_ref[...], preferred_element_type=jnp.float32)
        + jnp.dot(h2, w_lin_h_ref[...], preferred_element_type=jnp.float32)
        + b_lin_ref[...], 0.0)
    logits = jnp.dot(hid, w_smax_ref[...], preferred_element_type=jnp.float32) + b_smax_ref[...]
    m = jnp.max(logits, axis=1, keepdims=True)
    s = logits - m
    logprob_ref[...] = s - jnp.log(jnp.sum(jnp.exp(s), axis=1, keepdims=True))


def _matchatt_classify_kernel(m_ref, maskc_ref, maskr_ref,
                              w_t_ref, b_t_ref, w_lin_ref, b_lin_ref,
                              w_smax_ref, b_smax_ref, logprob_ref):
    """MatchingAttention (att_type='general2') over all query timesteps of every
    conversation + relu(linear) + smax_fc + log_softmax(class dim).  One launch total."""
    n_conv = m_ref.shape[0]
    for b in range(n_conv):                                             # static unroll, tiny
        mb = m_ref[b]                                                   # (L, D) padded emotions
        mc = maskc_ref[b]                                               # (L, 1) key mask
        mr = maskr_ref[b]                                               # (1, L) key mask
        # transform(x) for all query rows at once
        yb = jnp.dot(mb, w_t_ref[...], preferred_element_type=jnp.float32) + b_t_ref[...]
        mm = mb * mc                                                    # masked memory
        # alpha_ = tanh( (x_ . M_masked) * mask ), softmax over keys, re-mask, renormalize
        sc = lax.dot_general(yb, mm, (((1,), (1,)), ((), ())),
                             preferred_element_type=jnp.float32) * mr   # (Lq, Lk)
        sc = jnp.tanh(sc)
        mx = jnp.max(sc, axis=1, keepdims=True)
        e = jnp.exp(sc - mx)
        sm = e / jnp.sum(e, axis=1, keepdims=True)
        am = sm * mr
        alpha = am / jnp.sum(am, axis=1, keepdims=True)
        att = jnp.dot(alpha, mb, preferred_element_type=jnp.float32)    # (L, D) attn_pool
        # classification head on attentive node features; dropout = identity (eval)
        hid = jnp.maximum(jnp.dot(att, w_lin_ref[...], preferred_element_type=jnp.float32)
                          + b_lin_ref[...], 0.0)
        logits = (jnp.dot(hid, w_smax_ref[...], preferred_element_type=jnp.float32)
                  + b_smax_ref[...])
        mx2 = jnp.max(logits, axis=1, keepdims=True)
        s = logits - mx2
        logprob_ref[b] = s - jnp.log(jnp.sum(jnp.exp(s), axis=1, keepdims=True))


# ---------------- parameter init (deterministic, uniform) ----------------

def init_params(key, f=NUM_FEATURES, h=HIDDEN, r=NUM_RELATIONS, nb=NUM_BASES, c=NUM_CLASSES):
    d = f + h
    ks = jax.random.split(key, 12)

    def u(k, shape, fan_in):
        s = 1.0 / np.sqrt(fan_in)
        return jax.random.uniform(k, shape, jnp.float32, -s, s)

    return {
        # RGCNConv(num_features, hidden, num_relations, num_bases=30)
        'rgcn': {'basis': u(ks[0], (nb, f, h), f),
                 'att': u(ks[1], (r, nb), nb),
                 'root': u(ks[2], (f, h), f),
                 'bias': u(ks[3], (1, h), f)},
        # GraphConv(hidden, hidden): neighbour weight + root Linear(with bias)
        'gconv': {'w_nb': u(ks[4], (h, h), h),
                  'w_root': u(ks[5], (h, h), h),
                  'b': u(ks[6], (1, h), h)},
        # MatchingAttention(d, d, att_type='general2').transform = Linear(d, d)
        'matchatt': {'w': u(ks[7], (d, d), d), 'b': u(ks[8], (1, d), d)},
        # linear: Linear(d, hidden); smax_fc: Linear(hidden, num_classes)
        'linear': {'w': u(ks[9], (d, h), d), 'b': u(ks[10], (1, h), d)},
        'smax_fc': {'w': u(ks[11], (h, c), h), 'b': jnp.zeros((1, c), jnp.float32)},
    }


# ---------------- forward (glue in JAX, compute in fused Pallas kernels) ----------------

def graph_network_forward(params, x, edge_index, edge_norm, edge_type,
                          seq_lengths, umask, nodal_attn=False, avec=False):
    n, f = x.shape
    n_pad = int(np.ceil(n / 8) * 8)                 # rows on a sublane multiple of 8

    # ---- one-time dense adjacency build (irregular per-edge scatter stays wrapper-side) ----
    src, dst = edge_index[0], edge_index[1]
    deg = jnp.zeros((n_pad,), jnp.float32).at[dst].add(1.0)
    inv_deg = 1.0 / jnp.maximum(deg, 1.0)
    # TODO(synk): aggregation follows torch-geometric 1.x RGCNConv (aggr='mean'); newer PyG
    # versions drop edge_norm and use sum aggregation.
    vals = edge_norm * inv_deg[dst]
    a_rel = jnp.zeros((NUM_RELATIONS, n_pad, n_pad),
                      jnp.float32).at[edge_type, dst, src].add(vals)
    a_gc = jnp.zeros((n_pad, n_pad), jnp.float32).at[dst, src].add(1.0)
    x_pad = jnp.pad(x, ((0, n_pad - n), (0, 0)))

    rg = params['rgcn']
    # fold the basis decomposition into explicit per-relation weights (weights only, one-time)
    w_rel = jnp.einsum('rb,bfh->rfh', rg['att'], rg['basis'])           # (R, F, H)
    lin_w = params['linear']['w']

    gcn_out, logprob_flat = pl.pallas_call(
        _graph_net_kernel,
        out_shape=(jax.ShapeDtypeStruct((n_pad, HIDDEN), jnp.float32),
                   jax.ShapeDtypeStruct((n_pad, NUM_CLASSES), jnp.float32)),
        in_specs=[_full_spec(x_pad.shape), _full_spec(a_rel.shape), _full_spec(a_gc.shape),
                  _full_spec(w_rel.shape), _full_spec(rg['root'].shape),
                  _full_spec(rg['bias'].shape),
                  _full_spec(params['gconv']['w_nb'].shape),
                  _full_spec(params['gconv']['w_root'].shape),
                  _full_spec(params['gconv']['b'].shape),
                  _full_spec((f, HIDDEN)), _full_spec((HIDDEN, HIDDEN)),
                  _full_spec(params['linear']['b'].shape),
                  _full_spec(params['smax_fc']['w'].shape),
                  _full_spec(params['smax_fc']['b'].shape)],
        out_specs=(_full_spec((n_pad, HIDDEN)), _full_spec((n_pad, NUM_CLASSES))),
    )(x_pad, a_rel, a_gc, w_rel, rg['root'], rg['bias'],
      params['gconv']['w_nb'], params['gconv']['w_root'], params['gconv']['b'],
      lin_w[:f], lin_w[f:], params['linear']['b'],
      params['smax_fc']['w'], params['smax_fc']['b'])

    if avec:
        # TODO(synk): avec=True (regression output without log_softmax) not implemented.
        raise NotImplementedError("avec=True path not implemented")

    if not nodal_attn:
        return logprob_flat[:n]                                          # (N, num_classes)

    # ---- nodal attention path: pad flat node features to (conversations, max_len, D) ----
    emotions = jnp.concatenate([x, gcn_out[:n]], axis=-1)                # (N, D)
    max_len = int(max(seq_lengths))
    starts = np.concatenate([[0], np.cumsum(seq_lengths)[:-1]])
    m_pad = jnp.stack([
        jnp.pad(emotions[int(s):int(s) + int(l)], ((0, max_len - int(l)), (0, 0)))
        for s, l in zip(starts, seq_lengths)], axis=0)                   # (Bc, L, D)
    umask_f = umask.astype(jnp.float32)
    maskc = umask_f[:, :, None]                                          # (Bc, L, 1)
    maskr = umask_f[:, None, :]                                          # (Bc, 1, L)
    bc = m_pad.shape[0]

    lp_pad = pl.pallas_call(
        _matchatt_classify_kernel,
        out_shape=jax.ShapeDtypeStruct((bc, max_len, NUM_CLASSES), jnp.float32),
        in_specs=[_full_spec(m_pad.shape), _full_spec(maskc.shape), _full_spec(maskr.shape),
                  _full_spec(params['matchatt']['w'].shape),
                  _full_spec(params['matchatt']['b'].shape),
                  _full_spec(lin_w.shape), _full_spec(params['linear']['b'].shape),
                  _full_spec(params['smax_fc']['w'].shape),
                  _full_spec(params['smax_fc']['b'].shape)],
        out_specs=_full_spec((bc, max_len, NUM_CLASSES)),
    )(m_pad, maskc, maskr, params['matchatt']['w'], params['matchatt']['b'],
      lin_w, params['linear']['b'], params['smax_fc']['w'], params['smax_fc']['b'])

    # torch.cat([log_prob[:, j, :][:seq_lengths[j]] ...]) -> pack valid rows, conversation-major
    return jnp.concatenate([lp_pad[j, :int(seq_lengths[j]), :] for j in range(bc)], axis=0)


# ---------------- main ----------------

if __name__ == "__main__":
    key = jax.random.PRNGKey(0)
    pkey, dkey = jax.random.split(key)
    params = init_params(pkey)

    # two conversations, lengths 8 and 6 -> 14 graph nodes (conversation-major ordering)
    seq_lengths = [8, 6]
    n_nodes = sum(seq_lengths)
    max_len = max(seq_lengths)

    # graph: all ordered pairs (incl. self loops) within each conversation
    src_l, dst_l = [], []
    off = 0
    for l in seq_lengths:
        for i in range(l):
            for j in range(l):
                src_l.append(off + j)
                dst_l.append(off + i)
        off += l
    edge_index = jnp.array([src_l, dst_l], dtype=jnp.int32)
    n_edges = edge_index.shape[1]

    ks = jax.random.split(dkey, 3)
    x = jax.random.normal(ks[0], (n_nodes, NUM_FEATURES), jnp.float32)
    edge_type = jax.random.randint(ks[1], (n_edges,), 0, NUM_RELATIONS)
    edge_norm = jax.random.uniform(ks[2], (n_edges,), jnp.float32, 0.1, 1.0)
    umask = jnp.array((np.arange(max_len)[None, :]
                       < np.array(seq_lengths)[:, None]).astype(np.float32))   # (Bc, L)

    log_prob = graph_network_forward(params, x, edge_index, edge_norm, edge_type,
                                     seq_lengths, umask, nodal_attn=False, avec=False)
    log_prob_attn = graph_network_forward(params, x, edge_index, edge_norm, edge_type,
                                          seq_lengths, umask, nodal_attn=True, avec=False)
    jax.block_until_ready((log_prob, log_prob_attn))

    assert log_prob.shape == (n_nodes, NUM_CLASSES)
    assert log_prob_attn.shape == (n_nodes, NUM_CLASSES)
    assert bool(jnp.all(jnp.isfinite(log_prob)))
    assert bool(jnp.all(jnp.isfinite(log_prob_attn)))
    print("KERNEL_OK")
</pallas_src>

<mosaic_0001>
module attributes {stable_mosaic.version = 11 : i64} {
  func.func @_graph_net_kernel(%arg0: memref<16x32xf32, #tpu.memory_space<vmem>>, %arg1: memref<8x16x16xf32, #tpu.memory_space<vmem>>, %arg2: memref<16x16xf32, #tpu.memory_space<vmem>>, %arg3: memref<8x32x64xf32, #tpu.memory_space<vmem>>, %arg4: memref<32x64xf32, #tpu.memory_space<vmem>>, %arg5: memref<1x64xf32, #tpu.memory_space<vmem>>, %arg6: memref<64x64xf32, #tpu.memory_space<vmem>>, %arg7: memref<64x64xf32, #tpu.memory_space<vmem>>, %arg8: memref<1x64xf32, #tpu.memory_space<vmem>>, %arg9: memref<32x64xf32, #tpu.memory_space<vmem>>, %arg10: memref<64x64xf32, #tpu.memory_space<vmem>>, %arg11: memref<1x64xf32, #tpu.memory_space<vmem>>, %arg12: memref<64x7xf32, #tpu.memory_space<vmem>>, %arg13: memref<1x7xf32, #tpu.memory_space<vmem>>, %arg14: memref<16x64xf32, #tpu.memory_space<vmem>>, %arg15: memref<16x7xf32, #tpu.memory_space<vmem>>) attributes {dimension_semantics = [], scalar_prefetch = 0 : i64, scratch_operands = 0 : i64, tpu.core_type = #tpu.core_type<tc>} {
    %c0 = arith.constant 0 : index
    %c0_0 = arith.constant 0 : index
    %0 = vector.load %arg0[%c0, %c0_0] : memref<16x32xf32, #tpu.memory_space<vmem>>, vector<16x32xf32>
    %c0_1 = arith.constant 0 : index
    %c0_2 = arith.constant 0 : index
    %1 = vector.load %arg4[%c0_1, %c0_2] : memref<32x64xf32, #tpu.memory_space<vmem>>, vector<32x64xf32>
    %cst = arith.constant dense<0.000000e+00> : vector<16x64xf32>
    %2 = tpu.matmul %0, %1, %cst {dimension_numbers = #tpu.dot_dimension_numbers<[1], [0], [0], [1], [0, 0, 1, 1], [], []>} : vector<16x32xf32>, vector<32x64xf32>, vector<16x64xf32> -> vector<16x64xf32>
    %c0_3 = arith.constant 0 : index
    %c0_4 = arith.constant 0 : index
    %3 = vector.load %arg5[%c0_3, %c0_4] : memref<1x64xf32, #tpu.memory_space<vmem>>, vector<1x64xf32>
    %4 = vector.broadcast %3 : vector<1x64xf32> to vector<16x64xf32>
    %5 = arith.addf %2, %4 : vector<16x64xf32>
    %c0_5 = arith.constant 0 : index
    %c0_6 = arith.constant 0 : index
    %c0_7 = arith.constant 0 : index
    %6 = vector.load %arg3[%c0_5, %c0_6, %c0_7] : memref<8x32x64xf32, #tpu.memory_space<vmem>>, vector<1x32x64xf32>
    %7 = vector.shape_cast %6 : vector<1x32x64xf32> to vector<32x64xf32>
    %cst_8 = arith.constant dense<0.000000e+00> : vector<16x64xf32>
    %8 = tpu.matmul %0, %7, %cst_8 {dimension_numbers = #tpu.dot_dimension_numbers<[1], [0], [0], [1], [0, 0, 1, 1], [], []>} : vector<16x32xf32>, vector<32x64xf32>, vector<16x64xf32> -> vector<16x64xf32>
    %c0_9 = arith.constant 0 : index
    %c0_10 = arith.constant 0 : index
    %c0_11 = arith.constant 0 : index
    %9 = vector.load %arg1[%c0_9, %c0_10, %c0_11] : memref<8x16x16xf32, #tpu.memory_space<vmem>>, vector<1x16x16xf32>
    %10 = vector.shape_cast %9 : vector<1x16x16xf32> to vector<16x16xf32>
    %cst_12 = arith.constant dense<0.000000e+00> : vector<16x64xf32>
    %11 = tpu.matmul %10, %8, %cst_12 {dimension_numbers = #tpu.dot_dimension_numbers<[1], [0], [0], [1], [0, 0, 1, 1], [], []>} : vector<16x16xf32>, vector<16x64xf32>, vector<16x64xf32> -> vector<16x64xf32>
    %12 = arith.addf %5, %11 : vector<16x64xf32>
    %c1 = arith.constant 1 : index
    %c0_13 = arith.constant 0 : index
    %c0_14 = arith.constant 0 : index
    %13 = vector.load %arg3[%c1, %c0_13, %c0_14] : memref<8x32x64xf32, #tpu.memory_space<vmem>>, vector<1x32x64xf32>
    %14 = vector.shape_cast %13 : vector<1x32x64xf32> to vector<32x64xf32>
    %cst_15 = arith.constant dense<0.000000e+00> : vector<16x64xf32>
    %15 = tpu.matmul %0, %14, %cst_15 {dimension_numbers = #tpu.dot_dimension_numbers<[1], [0], [0], [1], [0, 0, 1, 1], [], []>} : vector<16x32xf32>, vector<32x64xf32>, vector<16x64xf32> -> vector<16x64xf32>
    %c1_16 = arith.constant 1 : index
    %c0_17 = arith.constant 0 : index
    %c0_18 = arith.constant 0 : index
    %16 = vector.load %arg1[%c1_16, %c0_17, %c0_18] : memref<8x16x16xf32, #tpu.memory_space<vmem>>, vector<1x16x16xf32>
    %17 = vector.shape_cast %16 : vector<1x16x16xf32> to vector<16x16xf32>
    %cst_19 = arith.constant dense<0.000000e+00> : vector<16x64xf32>
    %18 = tpu.matmul %17, %15, %cst_19 {dimension_numbers = #tpu.dot_dimension_numbers<[1], [0], [0], [1], [0, 0, 1, 1], [], []>} : vector<16x16xf32>, vector<16x64xf32>, vector<16x64xf32> -> vector<16x64xf32>
    %19 = arith.addf %12, %18 : vector<16x64xf32>
    %c2 = arith.constant 2 : index
    %c0_20 = arith.constant 0 : index
    %c0_21 = arith.constant 0 : index
    %20 = vector.load %arg3[%c2, %c0_20, %c0_21] : memref<8x32x64xf32, #tpu.memory_space<vmem>>, vector<1x32x64xf32>
    %21 = vector.shape_cast %20 : vector<1x32x64xf32> to vector<32x64xf32>
    %cst_22 = arith.constant dense<0.000000e+00> : vector<16x64xf32>
    %22 = tpu.matmul %0, %21, %cst_22 {dimension_numbers = #tpu.dot_dimension_numbers<[1], [0], [0], [1], [0, 0, 1, 1], [], []>} : vector<16x32xf32>, vector<32x64xf32>, vector<16x64xf32> -> vector<16x64xf32>
    %c2_23 = arith.constant 2 : index
    %c0_24 = arith.constant 0 : index
    %c0_25 = arith.constant 0 : index
    %23 = vector.load %arg1[%c2_23, %c0_24, %c0_25] : memref<8x16x16xf32, #tpu.memory_space<vmem>>, vector<1x16x16xf32>
    %24 = vector.shape_cast %23 : vector<1x16x16xf32> to vector<16x16xf32>
    %cst_26 = arith.constant dense<0.000000e+00> : vector<16x64xf32>
    %25 = tpu.matmul %24, %22, %cst_26 {dimension_numbers = #tpu.dot_dimension_numbers<[1], [0], [0], [1], [0, 0, 1, 1], [], []>} : vector<16x16xf32>, vector<16x64xf32>, vector<16x64xf32> -> vector<16x64xf32>
    %26 = arith.addf %19, %25 : vector<16x64xf32>
    %c3 = arith.constant 3 : index
    %c0_27 = arith.constant 0 : index
    %c0_28 = arith.constant 0 : index
    %27 = vector.load %arg3[%c3, %c0_27, %c0_28] : memref<8x32x64xf32, #tpu.memory_space<vmem>>, vector<1x32x64xf32>
    %28 = vector.shape_cast %27 : vector<1x32x64xf32> to vector<32x64xf32>
    %cst_29 = arith.constant dense<0.000000e+00> : vector<16x64xf32>
    %29 = tpu.matmul %0, %28, %cst_29 {dimension_numbers = #tpu.dot_dimension_numbers<[1], [0], [0], [1], [0, 0, 1, 1], [], []>} : vector<16x32xf32>, vector<32x64xf32>, vector<16x64xf32> -> vector<16x64xf32>
    %c3_30 = arith.constant 3 : index
    %c0_31 = arith.constant 0 : index
    %c0_32 = arith.constant 0 : index
    %30 = vector.load %arg1[%c3_30, %c0_31, %c0_32] : memref<8x16x16xf32, #tpu.memory_space<vmem>>, vector<1x16x16xf32>
    %31 = vector.shape_cast %30 : vector<1x16x16xf32> to vector<16x16xf32>
    %cst_33 = arith.constant dense<0.000000e+00> : vector<16x64xf32>
    %32 = tpu.matmul %31, %29, %cst_33 {dimension_numbers = #tpu.dot_dimension_numbers<[1], [0], [0], [1], [0, 0, 1, 1], [], []>} : vector<16x16xf32>, vector<16x64xf32>, vector<16x64xf32> -> vector<16x64xf32>
    %33 = arith.addf %26, %32 : vector<16x64xf32>
    %c4 = arith.constant 4 : index
    %c0_34 = arith.constant 0 : index
    %c0_35 = arith.constant 0 : index
    %34 = vector.load %arg3[%c4, %c0_34, %c0_35] : memref<8x32x64xf32, #tpu.memory_space<vmem>>, vector<1x32x64xf32>
    %35 = vector.shape_cast %34 : vector<1x32x64xf32> to vector<32x64xf32>
    %cst_36 = arith.constant dense<0.000000e+00> : vector<16x64xf32>
    %36 = tpu.matmul %0, %35, %cst_36 {dimension_numbers = #tpu.dot_dimension_numbers<[1], [0], [0], [1], [0, 0, 1, 1], [], []>} : vector<16x32xf32>, vector<32x64xf32>, vector<16x64xf32> -> vector<16x64xf32>
    %c4_37 = arith.constant 4 : index
    %c0_38 = arith.constant 0 : index
    %c0_39 = arith.constant 0 : index
    %37 = vector.load %arg1[%c4_37, %c0_38, %c0_39] : memref<8x16x16xf32, #tpu.memory_space<vmem>>, vector<1x16x16xf32>
    %38 = vector.shape_cast %37 : vector<1x16x16xf32> to vector<16x16xf32>
    %cst_40 = arith.constant dense<0.000000e+00> : vector<16x64xf32>
    %39 = tpu.matmul %38, %36, %cst_40 {dimension_numbers = #tpu.dot_dimension_numbers<[1], [0], [0], [1], [0, 0, 1, 1], [], []>} : vector<16x16xf32>, vector<16x64xf32>, vector<16x64xf32> -> vector<16x64xf32>
    %40 = arith.addf %33, %39 : vector<16x64xf32>
    %c5 = arith.constant 5 : index
    %c0_41 = arith.constant 0 : index
    %c0_42 = arith.constant 0 : index
    %41 = vector.load %arg3[%c5, %c0_41, %c0_42] : memref<8x32x64xf32, #tpu.memory_space<vmem>>, vector<1x32x64xf32>
    %42 = vector.shape_cast %41 : vector<1x32x64xf32> to vector<32x64xf32>
    %cst_43 = arith.constant dense<0.000000e+00> : vector<16x64xf32>
    %43 = tpu.matmul %0, %42, %cst_43 {dimension_numbers = #tpu.dot_dimension_numbers<[1], [0], [0], [1], [0, 0, 1, 1], [], []>} : vector<16x32xf32>, vector<32x64xf32>, vector<16x64xf32> -> vector<16x64xf32>
    %c5_44 = arith.constant 5 : index
    %c0_45 = arith.constant 0 : index
    %c0_46 = arith.constant 0 : index
    %44 = vector.load %arg1[%c5_44, %c0_45, %c0_46] : memref<8x16x16xf32, #tpu.memory_space<vmem>>, vector<1x16x16xf32>
    %45 = vector.shape_cast %44 : vector<1x16x16xf32> to vector<16x16xf32>
    %cst_47 = arith.constant dense<0.000000e+00> : vector<16x64xf32>
    %46 = tpu.matmul %45, %43, %cst_47 {dimension_numbers = #tpu.dot_dimension_numbers<[1], [0], [0], [1], [0, 0, 1, 1], [], []>} : vector<16x16xf32>, vector<16x64xf32>, vector<16x64xf32> -> vector<16x64xf32>
    %47 = arith.addf %40, %46 : vector<16x64xf32>
    %c6 = arith.constant 6 : index
    %c0_48 = arith.constant 0 : index
    %c0_49 = arith.constant 0 : index
    %48 = vector.load %arg3[%c6, %c0_48, %c0_49] : memref<8x32x64xf32, #tpu.memory_space<vmem>>, vector<1x32x64xf32>
    %49 = vector.shape_cast %48 : vector<1x32x64xf32> to vector<32x64xf32>
    %cst_50 = arith.constant dense<0.000000e+00> : vector<16x64xf32>
    %50 = tpu.matmul %0, %49, %cst_50 {dimension_numbers = #tpu.dot_dimension_numbers<[1], [0], [0], [1], [0, 0, 1, 1], [], []>} : vector<16x32xf32>, vector<32x64xf32>, vector<16x64xf32> -> vector<16x64xf32>
    %c6_51 = arith.constant 6 : index
    %c0_52 = arith.constant 0 : index
    %c0_53 = arith.constant 0 : index
    %51 = vector.load %arg1[%c6_51, %c0_52, %c0_53] : memref<8x16x16xf32, #tpu.memory_space<vmem>>, vector<1x16x16xf32>
    %52 = vector.shape_cast %51 : vector<1x16x16xf32> to vector<16x16xf32>
    %cst_54 = arith.constant dense<0.000000e+00> : vector<16x64xf32>
    %53 = tpu.matmul %52, %50, %cst_54 {dimension_numbers = #tpu.dot_dimension_numbers<[1], [0], [0], [1], [0, 0, 1, 1], [], []>} : vector<16x16xf32>, vector<16x64xf32>, vector<16x64xf32> -> vector<16x64xf32>
    %54 = arith.addf %47, %53 : vector<16x64xf32>
    %c7 = arith.constant 7 : index
    %c0_55 = arith.constant 0 : index
    %c0_56 = arith.constant 0 : index
    %55 = vector.load %arg3[%c7, %c0_55, %c0_56] : memref<8x32x64xf32, #tpu.memory_space<vmem>>, vector<1x32x64xf32>
    %56 = vector.shape_cast %55 : vector<1x32x64xf32> to vector<32x64xf32>
    %cst_57 = arith.constant dense<0.000000e+00> : vector<16x64xf32>
    %57 = tpu.matmul %0, %56, %cst_57 {dimension_numbers = #tpu.dot_dimension_numbers<[1], [0], [0], [1], [0, 0, 1, 1], [], []>} : vector<16x32xf32>, vector<32x64xf32>, vector<16x64xf32> -> vector<16x64xf32>
    %c7_58 = arith.constant 7 : index
    %c0_59 = arith.constant 0 : index
    %c0_60 = arith.constant 0 : index
    %58 = vector.load %arg1[%c7_58, %c0_59, %c0_60] : memref<8x16x16xf32, #tpu.memory_space<vmem>>, vector<1x16x16xf32>
    %59 = vector.shape_cast %58 : vector<1x16x16xf32> to vector<16x16xf32>
    %cst_61 = arith.constant dense<0.000000e+00> : vector<16x64xf32>
    %60 = tpu.matmul %59, %57, %cst_61 {dimension_numbers = #tpu.dot_dimension_numbers<[1], [0], [0], [1], [0, 0, 1, 1], [], []>} : vector<16x16xf32>, vector<16x64xf32>, vector<16x64xf32> -> vector<16x64xf32>
    %61 = arith.addf %54, %60 : vector<16x64xf32>
    %c0_62 = arith.constant 0 : index
    %c0_63 = arith.constant 0 : index
    %62 = vector.load %arg6[%c0_62, %c0_63] : memref<64x64xf32, #tpu.memory_space<vmem>>, vector<64x64xf32>
    %cst_64 = arith.constant dense<0.000000e+00> : vector<16x64xf32>
    %63 = tpu.matmul %61, %62, %cst_64 {dimension_numbers = #tpu.dot_dimension_numbers<[1], [0], [0], [1], [0, 0, 1, 1], [], []>} : vector<16x64xf32>, vector<64x64xf32>, vector<16x64xf32> -> vector<16x64xf32>
    %c0_65 = arith.constant 0 : index
    %c0_66 = arith.constant 0 : index
    %64 = vector.load %arg2[%c0_65, %c0_66] : memref<16x16xf32, #tpu.memory_space<vmem>>, vector<16x16xf32>
    %cst_67 = arith.constant dense<0.000000e+00> : vector<16x64xf32>
    %65 = tpu.matmul %64, %63, %cst_67 {dimension_numbers = #tpu.dot_dimension_numbers<[1], [0], [0], [1], [0, 0, 1, 1], [], []>} : vector<16x16xf32>, vector<16x64xf32>, vector<16x64xf32> -> vector<16x64xf32>
    %c0_68 = arith.constant 0 : index
    %c0_69 = arith.constant 0 : index
    %66 = vector.load %arg7[%c0_68, %c0_69] : memref<64x64xf32, #tpu.memory_space<vmem>>, vector<64x64xf32>
    %cst_70 = arith.constant dense<0.000000e+00> : vector<16x64xf32>
    %67 = tpu.matmul %61, %66, %cst_70 {dimension_numbers = #tpu.dot_dimension_numbers<[1], [0], [0], [1], [0, 0, 1, 1], [], []>} : vector<16x64xf32>, vector<64x64xf32>, vector<16x64xf32> -> vector<16x64xf32>
    %68 = arith.addf %65, %67 : vector<16x64xf32>
    %c0_71 = arith.constant 0 : index
    %c0_72 = arith.constant 0 : index
    %69 = vector.load %arg8[%c0_71, %c0_72] : memref<1x64xf32, #tpu.memory_space<vmem>>, vector<1x64xf32>
    %70 = vector.broadcast %69 : vector<1x64xf32> to vector<16x64xf32>
    %71 = arith.addf %68, %70 : vector<16x64xf32>
    %c0_73 = arith.constant 0 : index
    %c0_74 = arith.constant 0 : index
    %72 = vector.load %arg14[%c0_73, %c0_74] : memref<16x64xf32, #tpu.memory_space<vmem>>, vector<16x64xf32>
    tpu.vector_store %arg14[%c0_73, %c0_74], %71 {strides = array<i32>} : memref<16x64xf32, #tpu.memory_space<vmem>>, vector<16x64xf32>,
    %c0_75 = arith.constant 0 : index
    %c0_76 = arith.constant 0 : index
    %73 = vector.load %arg9[%c0_75, %c0_76] : memref<32x64xf32, #tpu.memory_space<vmem>>, vector<32x64xf32>
    %cst_77 = arith.constant dense<0.000000e+00> : vector<16x64xf32>
    %74 = tpu.matmul %0, %73, %cst_77 {dimension_numbers = #tpu.dot_dimension_numbers<[1], [0], [0], [1], [0, 0, 1, 1], [], []>} : vector<16x32xf32>, vector<32x64xf32>, vector<16x64xf32> -> vector<16x64xf32>
    %c0_78 = arith.constant 0 : index
    %c0_79 = arith.constant 0 : index
    %75 = vector.load %arg10[%c0_78, %c0_79] : memref<64x64xf32, #tpu.memory_space<vmem>>, vector<64x64xf32>
    %cst_80 = arith.constant dense<0.000000e+00> : vector<16x64xf32>
    %76 = tpu.matmul %71, %75, %cst_80 {dimension_numbers = #tpu.dot_dimension_numbers<[1], [0], [0], [1], [0, 0, 1, 1], [], []>} : vector<16x64xf32>, vector<64x64xf32>, vector<16x64xf32> -> vector<16x64xf32>
    %77 = arith.addf %74, %76 : vector<16x64xf32>
    %c0_81 = arith.constant 0 : index
    %c0_82 = arith.constant 0 : index
    %78 = vector.load %arg11[%c0_81, %c0_82] : memref<1x64xf32, #tpu.memory_space<vmem>>, vector<1x64xf32>
    %79 = vector.broadcast %78 : vector<1x64xf32> to vector<16x64xf32>
    %80 = arith.addf %77, %79 : vector<16x64xf32>
    %cst_83 = arith.constant 0.000000e+00 : f32
    %81 = vector.broadcast %cst_83 : f32 to vector<16x64xf32>
    %82 = arith.maximumf %80, %81 : vector<16x64xf32>
    %c0_84 = arith.constant 0 : index
    %c0_85 = arith.constant 0 : index
    %83 = vector.load %arg12[%c0_84, %c0_85] : memref<64x7xf32, #tpu.memory_space<vmem>>, vector<64x7xf32>
    %cst_86 = arith.constant dense<0.000000e+00> : vector<16x7xf32>
    %84 = tpu.matmul %82, %83, %cst_86 {dimension_numbers = #tpu.dot_dimension_numbers<[1], [0], [0], [1], [0, 0, 1, 1], [], []>} : vector<16x64xf32>, vector<64x7xf32>, vector<16x7xf32> -> vector<16x7xf32>
    %c0_87 = arith.constant 0 : index
    %c0_88 = arith.constant 0 : index
    %85 = vector.load %arg13[%c0_87, %c0_88] : memref<1x7xf32, #tpu.memory_space<vmem>>, vector<1x7xf32>
    %86 = vector.broadcast %85 : vector<1x7xf32> to vector<16x7xf32>
    %87 = arith.addf %84, %86 : vector<16x7xf32>
    %cst_89 = arith.constant dense<0xFF800000> : vector<16xf32>
    %88 = vector.multi_reduction <maximumf>, %87, %cst_89 [1] : vector<16x7xf32> to vector<16xf32>
    %89 = vector.shape_cast %88 : vector<16xf32> to vector<16x1xf32>
    %90 = vector.broadcast %89 : vector<16x1xf32> to vector<16x7xf32>
    %91 = arith.subf %87, %90 : vector<16x7xf32>
    %92 = math.exp %91 : vector<16x7xf32>
    %cst_90 = arith.constant dense<0.000000e+00> : vector<16xf32>
    %93 = vector.multi_reduction <add>, %92, %cst_90 [1] : vector<16x7xf32> to vector<16xf32>
    %94 = vector.shape_cast %93 : vector<16xf32> to vector<16x1xf32>
    %95 = math.log %94 : vector<16x1xf32>
    %96 = vector.broadcast %95 : vector<16x1xf32> to vector<16x7xf32>
    %97 = arith.subf %91, %96 : vector<16x7xf32>
    %c0_91 = arith.constant 0 : index
    %c0_92 = arith.constant 0 : index
    %98 = vector.load %arg15[%c0_91, %c0_92] : memref<16x7xf32, #tpu.memory_space<vmem>>, vector<16x7xf32>
    tpu.vector_store %arg15[%c0_91, %c0_92], %97 {strides = array<i32>} : memref<16x7xf32, #tpu.memory_space<vmem>>, vector<16x7xf32>,
    return
  }
}

</mosaic_0001>

<llo_original>
// kernel: tpu_custom_call.1
$region0: #{tpu_custom_call.1}
  #allocation0 [shape = 'u32[]', space=smem, size = 0x4, offset = 0x4, fixed_abs, tag = 'smem constant byte address 0x4 - core index']
  #allocation1 [shape = 'u32[144,128]{1,0:T(1,128)}', space=vmem, size = 0x12000, scoped, tag = 'internal scratch']
  %s0 = inlined_call_operand.vmem [shape: f32[16,32], index: 0, kind: input, shape index: {}]
  %s1 = inlined_call_operand.hbm [shape: f32[8,16,16], index: 1, kind: input, shape index: {}]
  %s2 = inlined_call_operand.hbm [shape: f32[16,16], index: 2, kind: input, shape index: {}]
  %s3 = inlined_call_operand.hbm [shape: f32[8,32,64], index: 3, kind: input, shape index: {}]
  %s4 = inlined_call_operand.hbm [shape: f32[32,64], index: 4, kind: input, shape index: {}]
  %s5 = inlined_call_operand.hbm [shape: f32[1,64], index: 5, kind: input, shape index: {}]
  %s6 = inlined_call_operand.vmem [shape: f32[64,64], index: 6, kind: input, shape index: {}]
  %s7 = inlined_call_operand.hbm [shape: f32[64,64], index: 7, kind: input, shape index: {}]
  %s8 = inlined_call_operand.hbm [shape: f32[1,64], index: 8, kind: input, shape index: {}]
  %s9 = inlined_call_operand.hbm [shape: f32[32,64], index: 9, kind: input, shape index: {}]
  %s10 = inlined_call_operand.hbm [shape: f32[64,64], index: 10, kind: input, shape index: {}]
  %s11 = inlined_call_operand.vmem [shape: f32[1,64], index: 11, kind: input, shape index: {}]
  %s12 = inlined_call_operand.vmem [shape: f32[64,7], index: 12, kind: input, shape index: {}]
  %s13 = inlined_call_operand.vmem [shape: f32[1,7], index: 13, kind: input, shape index: {}]
  %s14 = inlined_call_operand.hbm [shape: f32[16,64], index: 14, kind: output, shape index: {0}]
  %s15 = inlined_call_operand.vmem [shape: f32[16,7], index: 15, kind: output, shape index: {1}]
  %16 = xla_tuple %s14, %s15
  %s17 = sld [smem:[#allocation0]]
  $region110: #{tpu_custom_call.1} parent=0
    _
  %s19 = ssub.s32 1, %s17
  %s20 = scalar_select 0, %s19, %s17
  $region1: #{tpu_custom_call.1} parent=0
    #allocation2 [shape = 'u8[65536]{0}', space=vmem, size = 0x10000, scoped, tag = 'input window, operand 1, single buffered']
    #allocation3 [shape = 's32[1]{0}', space=sflag, size = 0x4, scoped, tag = 'scoped memory for tpu_custom_call.1']
    #allocation4 [shape = 's32[1]{0}', space=sflag, size = 0x4, scoped, tag = 'scoped memory for tpu_custom_call.1']
    #allocation5 [shape = 'u8[8192]{0}', space=vmem, size = 0x2000, scoped, tag = 'input window, operand 2, single buffered']
    #allocation6 [shape = 's32[1]{0}', space=sflag, size = 0x4, scoped, tag = 'scoped memory for tpu_custom_call.1']
    #allocation7 [shape = 'u8[131072]{0}', space=vmem, size = 0x20000, scoped, tag = 'input window, operand 3, single buffered']
    #allocation8 [shape = 'u8[16384]{0}', space=vmem, size = 0x4000, scoped, tag = 'input window, operand 4, single buffered']
    #allocation9 [shape = 's32[1]{0}', space=sflag, size = 0x4, scoped, tag = 'scoped memory for tpu_custom_call.1']
    #allocation10 [shape = 'u8[512]{0}', space=vmem, size = 0x400, scoped, tag = 'input window, operand 5, single buffered']
    #allocation11 [shape = 'u8[32768]{0}', space=vmem, size = 0x8000, scoped, tag = 'input window, operand 7, single buffered']
    #allocation12 [shape = 's32[1]{0}', space=sflag, size = 0x4, scoped, tag = 'scoped memory for tpu_custom_call.1']
    #allocation13 [shape = 'u8[512]{0}', space=vmem, size = 0x400, scoped, tag = 'input window, operand 8, single buffered']
    #allocation14 [shape = 'u8[16384]{0}', space=vmem, size = 0x4000, scoped, tag = 'input window, operand 9, single buffered']
    #allocation15 [shape = 's32[1]{0}', space=sflag, size = 0x4, scoped, tag = 'scoped memory for tpu_custom_call.1']
    #allocation16 [shape = 'u8[32768]{0}', space=vmem, size = 0x8000, scoped, tag = 'input window, operand 10, single buffered']
    #allocation17 [shape = 'u8[8192]{0}', space=vmem, size = 0x2000, scoped, tag = 'output window, operand 0, single buffered']
    %21 = vsyncpa [#allocation3], 0
    %22 = vsyncpa [#allocation6], 0
    %23 = vsyncpa [#allocation9], 0
    %24 = vsyncpa [#allocation12], 0
    %25 = vsyncpa [#allocation15], 0
    %26 = vsyncpa [#allocation4], 0
    // Predicated region
    $region2: #{tpu_custom_call.1} parent=1 // pred_check
      _
    $region3: #{tpu_custom_call.1} parent=1 // pred_check_branch
      %28 = sbr.rel (0) target = $region5
    $region4: #{tpu_custom_call.1} parent=1 // pred_region
      _
    $region5: #{tpu_custom_call.1} parent=1 // pred_fallthru
      _
    // Predicated region
    $region6: #{tpu_custom_call.1} parent=1 // pred_check
      _
    $region7: #{tpu_custom_call.1} parent=1 // pred_check_branch
      %30 = sbr.rel (0) target = $region9
    $region8: #{tpu_custom_call.1} parent=1 // pred_region
      %s32 = ssub.s32 2048, 2048
      %33 = vsyncadd [#allocation3], %s32
      %s34 = sshll.u32 [#allocation2], 4
      %s35 = int_to_ptr.vmem [resolvable:$true] %s34
      %40 = dma.hbm_to_vmem [thread:$0]  %s1, 2048, %s35, [#allocation3], 128, 128, 8
    $region9: #{tpu_custom_call.1} parent=1 // pred_fallthru
      _
    // Predicated region
    $region10: #{tpu_custom_call.1} parent=1 // pred_check
      _
    $region11: #{tpu_custom_call.1} parent=1 // pred_check_branch
      %42 = sbr.rel (0) target = $region13
    $region12: #{tpu_custom_call.1} parent=1 // pred_region
      %s44 = ssub.s32 256, 256
      %45 = vsyncadd [#allocation6], %s44
      %s46 = sshll.u32 [#allocation5], 4
      %s47 = int_to_ptr.vmem [resolvable:$true] %s46
      %52 = dma.hbm_to_vmem [thread:$0]  %s2, 256, %s47, [#allocation6], 128, 128, 8
    $region13: #{tpu_custom_call.1} parent=1 // pred_fallthru
      _
    // Predicated region
    $region14: #{tpu_custom_call.1} parent=1 // pred_check
      _
    $region15: #{tpu_custom_call.1} parent=1 // pred_check_branch
      %54 = sbr.rel (0) target = $region17
    $region16: #{tpu_custom_call.1} parent=1 // pred_region
      %s56 = ssub.s32 4096, 4096
      %57 = vsyncadd [#allocation6], %s56
      %s58 = sshll.u32 [#allocation7], 4
      %s59 = int_to_ptr.vmem [resolvable:$true] %s58
      %64 = dma.hbm_to_vmem [thread:$0]  %s3, 4096, %s59, [#allocation6], 128, 128, 8
    $region17: #{tpu_custom_call.1} parent=1 // pred_fallthru
      _
    // Predicated region
    $region18: #{tpu_custom_call.1} parent=1 // pred_check
      _
    $region19: #{tpu_custom_call.1} parent=1 // pred_check_branch
      %66 = sbr.rel (0) target = $region21
    $region20: #{tpu_custom_call.1} parent=1 // pred_region
      %s68 = ssub.s32 512, 512
      %69 = vsyncadd [#allocation9], %s68
      %s70 = sshll.u32 [#allocation8], 4
      %s71 = int_to_ptr.vmem [resolvable:$true] %s70
      %76 = dma.hbm_to_vmem [thread:$0]  %s4, 512, %s71, [#allocation9], 128, 128, 8
    $region21: #{tpu_custom_call.1} parent=1 // pred_fallthru
      _
    // Predicated region
    $region22: #{tpu_custom_call.1} parent=1 // pred_check
      _
    $region23: #{tpu_custom_call.1} parent=1 // pred_check_branch
      %78 = sbr.rel (0) target = $region25
    $region24: #{tpu_custom_call.1} parent=1 // pred_region
      %s80 = ssub.s32 16, 16
      %81 = vsyncadd [#allocation9], %s80
      %s83 = sshll.u32 [#allocation10], 4
      %s84 = int_to_ptr.vmem [resolvable:$true] %s83
      %86 = dma.hbm_to_vmem [thread:$0]  %s5, 16, %s84, [#allocation9]
    $region25: #{tpu_custom_call.1} parent=1 // pred_fallthru
      _
    // Predicated region
    $region26: #{tpu_custom_call.1} parent=1 // pred_check
      _
    $region27: #{tpu_custom_call.1} parent=1 // pred_check_branch
      %88 = sbr.rel (0) target = $region29
    $region28: #{tpu_custom_call.1} parent=1 // pred_region
      _
    $region29: #{tpu_custom_call.1} parent=1 // pred_fallthru
      _
    // Predicated region
    $region30: #{tpu_custom_call.1} parent=1 // pred_check
      _
    $region31: #{tpu_custom_call.1} parent=1 // pred_check_branch
      %90 = sbr.rel (0) target = $region33
    $region32: #{tpu_custom_call.1} parent=1 // pred_region
      %s92 = ssub.s32 1024, 1024
      %93 = vsyncadd [#allocation12], %s92
      %s94 = sshll.u32 [#allocation11], 4
      %s95 = int_to_ptr.vmem [resolvable:$true] %s94
      %100 = dma.hbm_to_vmem [thread:$0]  %s7, 1024, %s95, [#allocation12], 128, 128, 8
    $region33: #{tpu_custom_call.1} parent=1 // pred_fallthru
      _
    // Predicated region
    $region34: #{tpu_custom_call.1} parent=1 // pred_check
      _
    $region35: #{tpu_custom_call.1} parent=1 // pred_check_branch
      %102 = sbr.rel (0) target = $region37
    $region36: #{tpu_custom_call.1} parent=1 // pred_region
      %s104 = ssub.s32 16, 16
      %105 = vsyncadd [#allocation12], %s104
      %s107 = sshll.u32 [#allocation13], 4
      %s108 = int_to_ptr.vmem [resolvable:$true] %s107
      %110 = dma.hbm_to_vmem [thread:$0]  %s8, 16, %s108, [#allocation12]
    $region37: #{tpu_custom_call.1} parent=1 // pred_fallthru
      _
    // Predicated region
    $region38: #{tpu_custom_call.1} parent=1 // pred_check
      _
    $region39: #{tpu_custom_call.1} parent=1 // pred_check_branch
      %112 = sbr.rel (0) target = $region41
    $region40: #{tpu_custom_call.1} parent=1 // pred_region
      %s114 = ssub.s32 512, 512
      %115 = vsyncadd [#allocation15], %s114
      %s116 = sshll.u32 [#allocation14], 4
      %s117 = int_to_ptr.vmem [resolvable:$true] %s116
      %122 = dma.hbm_to_vmem [thread:$0]  %s9, 512, %s117, [#allocation15], 128, 128, 8
    $region41: #{tpu_custom_call.1} parent=1 // pred_fallthru
      _
    // Predicated region
    $region42: #{tpu_custom_call.1} parent=1 // pred_check
      _
    $region43: #{tpu_custom_call.1} parent=1 // pred_check_branch
      %124 = sbr.rel (0) target = $region45
    $region44: #{tpu_custom_call.1} parent=1 // pred_region
      %s126 = ssub.s32 1024, 1024
      %127 = vsyncadd [#allocation15], %s126
      %s128 = sshll.u32 [#allocation16], 4
      %s129 = int_to_ptr.vmem [resolvable:$true] %s128
      %134 = dma.hbm_to_vmem [thread:$0]  %s10, 1024, %s129, [#allocation15], 128, 128, 8
    $region45: #{tpu_custom_call.1} parent=1 // pred_fallthru
      _
    // Predicated region
    $region46: #{tpu_custom_call.1} parent=1 // pred_check
      _
    $region47: #{tpu_custom_call.1} parent=1 // pred_check_branch
      %136 = sbr.rel (0) target = $region49
    $region48: #{tpu_custom_call.1} parent=1 // pred_region
      _
    $region49: #{tpu_custom_call.1} parent=1 // pred_fallthru
      _
    // Predicated region
    $region50: #{tpu_custom_call.1} parent=1 // pred_check
      _
    $region51: #{tpu_custom_call.1} parent=1 // pred_check_branch
      %138 = sbr.rel (0) target = $region53
    $region52: #{tpu_custom_call.1} parent=1 // pred_region
      _
    $region53: #{tpu_custom_call.1} parent=1 // pred_fallthru
      _
    // Predicated region
    $region54: #{tpu_custom_call.1} parent=1 // pred_check
      _
    $region55: #{tpu_custom_call.1} parent=1 // pred_check_branch
      %140 = sbr.rel (0) target = $region57
    $region56: #{tpu_custom_call.1} parent=1 // pred_region
      _
    $region57: #{tpu_custom_call.1} parent=1 // pred_fallthru
      _
    // Predicated region
    $region58: #{tpu_custom_call.1} parent=1 // pred_check
      _
    $region59: #{tpu_custom_call.1} parent=1 // pred_check_branch
      %142 = sbr.rel (0) target = $region61
    $region60: #{tpu_custom_call.1} parent=1 // pred_region
      %143 = dma.done [#allocation3], 2048
    $region61: #{tpu_custom_call.1} parent=1 // pred_fallthru
      _
    // Predicated region
    $region62: #{tpu_custom_call.1} parent=1 // pred_check
      _
    $region63: #{tpu_custom_call.1} parent=1 // pred_check_branch
      %145 = sbr.rel (0) target = $region65
    $region64: #{tpu_custom_call.1} parent=1 // pred_region
      %146 = dma.done [#allocation6], 256
    $region65: #{tpu_custom_call.1} parent=1 // pred_fallthru
      _
    // Predicated region
    $region66: #{tpu_custom_call.1} parent=1 // pred_check
      _
    $region67: #{tpu_custom_call.1} parent=1 // pred_check_branch
      %148 = sbr.rel (0) target = $region69
    $region68: #{tpu_custom_call.1} parent=1 // pred_region
      %149 = dma.done [#allocation6], 4096
    $region69: #{tpu_custom_call.1} parent=1 // pred_fallthru
      _
    // Predicated region
    $region70: #{tpu_custom_call.1} parent=1 // pred_check
      _
    $region71: #{tpu_custom_call.1} parent=1 // pred_check_branch
      %151 = sbr.rel (0) target = $region73
    $region72: #{tpu_custom_call.1} parent=1 // pred_region
      %152 = dma.done [#allocation9], 512
    $region73: #{tpu_custom_call.1} parent=1 // pred_fallthru
      _
    // Predicated region
    $region74: #{tpu_custom_call.1} parent=1 // pred_check
      _
    $region75: #{tpu_custom_call.1} parent=1 // pred_check_branch
      %154 = sbr.rel (0) target = $region77
    $region76: #{tpu_custom_call.1} parent=1 // pred_region
      %155 = dma.done [#allocation9], 16
    $region77: #{tpu_custom_call.1} parent=1 // pred_fallthru
      _
    // Predicated region
    $region78: #{tpu_custom_call.1} parent=1 // pred_check
      _
    $region79: #{tpu_custom_call.1} parent=1 // pred_check_branch
      %157 = sbr.rel (0) target = $region81
    $region80: #{tpu_custom_call.1} parent=1 // pred_region
      %158 = dma.done [#allocation12], 1024
    $region81: #{tpu_custom_call.1} parent=1 // pred_fallthru
      _
    // Predicated region
    $region82: #{tpu_custom_call.1} parent=1 // pred_check
      _
    $region83: #{tpu_custom_call.1} parent=1 // pred_check_branch
      %160 = sbr.rel (0) target = $region85
    $region84: #{tpu_custom_call.1} parent=1 // pred_region
      %161 = dma.done [#allocation12], 16
    $region85: #{tpu_custom_call.1} parent=1 // pred_fallthru
      _
    // Predicated region
    $region86: #{tpu_custom_call.1} parent=1 // pred_check
      _
    $region87: #{tpu_custom_call.1} parent=1 // pred_check_branch
      %163 = sbr.rel (0) target = $region89
    $region88: #{tpu_custom_call.1} parent=1 // pred_region
      %164 = dma.done [#allocation15], 512
    $region89: #{tpu_custom_call.1} parent=1 // pred_fallthru
      _
    // Predicated region
    $region90: #{tpu_custom_call.1} parent=1 // pred_check
      _
    $region91: #{tpu_custom_call.1} parent=1 // pred_check_branch
      %166 = sbr.rel (0) target = $region93
    $region92: #{tpu_custom_call.1} parent=1 // pred_region
      %167 = dma.done [#allocation15], 1024
    $region93: #{tpu_custom_call.1} parent=1 // pred_fallthru
      _
    %v168 = vld [vmem:[%s0] sm:$0xff]
    %v169 = vld [vmem:[%s0 + $0x8] sm:$0xff]
    %v170 = vld [vmem:[#allocation8] sm:$0xff]
    %v171 = vld [vmem:[#allocation8 + $0x8] sm:$0xff]
    %v172 = vld [vmem:[#allocation8 + $0x10] sm:$0xff]
    %v173 = vld [vmem:[#allocation8 + $0x18] sm:$0xff]
    %v174 = vld [vmem:[#allocation10] sm:$0x1]
    %v176 = vlaneseq
    %v177 = vshrl.u32 %v176, 7
    %v178 = vsub.s32 0, %v177
    %v179 = vrot.slane %v174, %v178
    %vm181 = vcmask 261120
    %v183 = vsel %vm181, %v168, 0
    %v186 = vsel %vm181, %v169, 0
    %188 = vmatprep.subr.mxu0 0.0
    %189 = vmatpush1.msra.mxu0 0.0
    %190 = vmatprep.subr.mxu0 0.0
    %191 = vmatpush1.msra.mxu0 0.0
    %192 = vmatprep.subr.mxu0 0.0
    %193 = vmatpush1.msra.mxu0 0.0
    %194 = vmatprep.subr.mxu0 0.0
    %195 = vmatpush1.msra.mxu0 0.0
    %196 = vmatprep.subr.mxu0 0.0
    %197 = vmatpush1.msra.mxu0 0.0
    %198 = vmatprep.subr.mxu0 0.0
    %199 = vmatpush1.msra.mxu0 0.0
    %200 = vmatprep.subr.mxu0 0.0
    %201 = vmatpush1.msra.mxu0 0.0
    %202 = vmatprep.subr.mxu0 0.0
    %203 = vmatpush1.msra.mxu0 0.0
    %204 = vmatprep.subr.mxu0 0.0
    %205 = vmatpush1.msra.mxu0 0.0
    %206 = vmatprep.subr.mxu0 0.0
    %207 = vmatpush1.msra.mxu0 0.0
    %208 = vmatprep.subr.mxu0 0.0
    %209 = vmatpush1.msra.mxu0 0.0
    %210 = vmatprep.subr.mxu0 0.0
    %211 = vmatpush1.msra.mxu0 0.0
    %212 = vmatprep.subr.mxu0 0.0
    %213 = vmatpush1.msra.mxu0 %v173
    %214 = vmatprep.subr.mxu0 0.0
    %215 = vmatpush1.msra.mxu0 %v172
    %216 = vmatprep.subr.mxu0 0.0
    %217 = vmatpush1.msra.mxu0 %v171
    %218 = vmatprep.subr.mxu0 0.0
    %219 = vmatpush1.msra.mxu0 %v170
    %220 = vmatprep.subr.mxu0 0.0
    %221 = vmatpush2.msra.mxu0 0.0
    %222 = vmatprep.subr.mxu0 0.0
    %223 = vmatpush2.msra.mxu0 0.0
    %224 = vmatprep.subr.mxu0 0.0
    %225 = vmatpush2.msra.mxu0 0.0
    %226 = vmatprep.subr.mxu0 0.0
    %227 = vmatpush2.msra.mxu0 0.0
    %228 = vmatprep.subr.mxu0 0.0
    %229 = vmatpush2.msra.mxu0 0.0
    %230 = vmatprep.subr.mxu0 0.0
    %231 = vmatpush2.msra.mxu0 0.0
    %232 = vmatprep.subr.mxu0 0.0
    %233 = vmatpush2.msra.mxu0 0.0
    %234 = vmatprep.subr.mxu0 0.0
    %235 = vmatpush2.msra.mxu0 0.0
    %236 = vmatprep.subr.mxu0 0.0
    %237 = vmatpush2.msra.mxu0 0.0
    %238 = vmatprep.subr.mxu0 0.0
    %239 = vmatpush2.msra.mxu0 0.0
    %240 = vmatprep.subr.mxu0 0.0
    %241 = vmatpush2.msra.mxu0 0.0
    %242 = vmatprep.subr.mxu0 0.0
    %243 = vmatpush2.msra.mxu0 0.0
    %244 = vmatprep.subr.mxu0 0.0
    %245 = vmatpush2.msra.mxu0 0.0
    %246 = vmatprep.subr.mxu0 0.0
    %247 = vmatpush2.msra.mxu0 0.0
    %248 = vmatprep.subr.mxu0 0.0
    %249 = vmatpush2.msra.mxu0 0.0
    %250 = vmatprep.subr.mxu0 0.0
    %251 = vmatpush2.msra.mxu0 0.0
    %252 = vmatprep.mubr.f32.mxu0 0.0
    %253 = vmatmul.mubr.f32.gmra.mxu0 %v183
    %v254 = vpop.f32.mrf.mxu0
    %v255 = vadd.f32 %v179, %v254
    %v256 = vpop.f32.mrf.mxu0
    %257 = vmatprep.mubr.f32.mxu0 0.0
    %258 = vmatmul.mubr.f32.gmra.mxu0 %v186
    %v259 = vpop.f32.mrf.mxu0
    %v260 = vadd.f32 %v179, %v259
    %v261 = vpop.f32.mrf.mxu0
    %262 = vdwg.mxu0
    %v263 = vld [vmem:[#allocation7] sm:$0xff]
    %v264 = vld [vmem:[#allocation7 + $0x8] sm:$0xff]
    %v265 = vld [vmem:[#allocation7 + $0x10] sm:$0xff]
    %v266 = vld [vmem:[#allocation7 + $0x18] sm:$0xff]
    %267 = vmatprep.subr.mxu0 0.0
    %268 = vmatpush1.msra.mxu0 0.0
    %269 = vmatprep.subr.mxu0 0.0
    %270 = vmatpush1.msra.mxu0 0.0
    %271 = vmatprep.subr.mxu0 0.0
    %272 = vmatpush1.msra.mxu0 0.0
    %273 = vmatprep.subr.mxu0 0.0
    %274 = vmatpush1.msra.mxu0 0.0
    %275 = vmatprep.subr.mxu0 0.0
    %276 = vmatpush1.msra.mxu0 0.0
    %277 = vmatprep.subr.mxu0 0.0
    %278 = vmatpush1.msra.mxu0 0.0
    %279 = vmatprep.subr.mxu0 0.0
    %280 = vmatpush1.msra.mxu0 0.0
    %281 = vmatprep.subr.mxu0 0.0
    %282 = vmatpush1.msra.mxu0 0.0
    %283 = vmatprep.subr.mxu0 0.0
    %284 = vmatpush1.msra.mxu0 0.0
    %285 = vmatprep.subr.mxu0 0.0
    %286 = vmatpush1.msra.mxu0 0.0
    %287 = vmatprep.subr.mxu0 0.0
    %288 = vmatpush1.msra.mxu0 0.0
    %289 = vmatprep.subr.mxu0 0.0
    %290 = vmatpush1.msra.mxu0 0.0
    %291 = vmatprep.subr.mxu0 0.0
    %292 = vmatpush1.msra.mxu0 %v266
    %293 = vmatprep.subr.mxu0 0.0
    %294 = vmatpush1.msra.mxu0 %v265
    %295 = vmatprep.subr.mxu0 0.0
    %296 = vmatpush1.msra.mxu0 %v264
    %297 = vmatprep.subr.mxu0 0.0
    %298 = vmatpush1.msra.mxu0 %v263
    %299 = vmatprep.subr.mxu0 0.0
    %300 = vmatpush2.msra.mxu0 0.0
    %301 = vmatprep.subr.mxu0 0.0
    %302 = vmatpush2.msra.mxu0 0.0
    %303 = vmatprep.subr.mxu0 0.0
    %304 = vmatpush2.msra.mxu0 0.0
    %305 = vmatprep.subr.mxu0 0.0
    %306 = vmatpush2.msra.mxu0 0.0
    %307 = vmatprep.subr.mxu0 0.0
    %308 = vmatpush2.msra.mxu0 0.0
    %309 = vmatprep.subr.mxu0 0.0
    %310 = vmatpush2.msra.mxu0 0.0
    %311 = vmatprep.subr.mxu0 0.0
    %312 = vmatpush2.msra.mxu0 0.0
    %313 = vmatprep.subr.mxu0 0.0
    %314 = vmatpush2.msra.mxu0 0.0
    %315 = vmatprep.subr.mxu0 0.0
    %316 = vmatpush2.msra.mxu0 0.0
    %317 = vmatprep.subr.mxu0 0.0
    %318 = vmatpush2.msra.mxu0 0.0
    %319 = vmatprep.subr.mxu0 0.0
    %320 = vmatpush2.msra.mxu0 0.0
    %321 = vmatprep.subr.mxu0 0.0
    %322 = vmatpush2.msra.mxu0 0.0
    %323 = vmatprep.subr.mxu0 0.0
    %324 = vmatpush2.msra.mxu0 0.0
    %325 = vmatprep.subr.mxu0 0.0
    %326 = vmatpush2.msra.mxu0 0.0
    %327 = vmatprep.subr.mxu0 0.0
    %328 = vmatpush2.msra.mxu0 0.0
    %329 = vmatprep.subr.mxu0 0.0
    %330 = vmatpush2.msra.mxu0 0.0
    %331 = vmatprep.mubr.f32.mxu0 0.0
    %332 = vmatmul.mubr.f32.gmra.mxu0 %v183
    %v333 = vpop.f32.mrf.mxu0
    %v334 = vadd.f32 0.0, %v333
    %v335 = vpop.f32.mrf.mxu0
    %336 = vmatprep.mubr.f32.mxu0 0.0
    %337 = vmatmul.mubr.f32.gmra.mxu0 %v186
    %v338 = vpop.f32.mrf.mxu0
    %v339 = vadd.f32 0.0, %v338
    %v340 = vpop.f32.mrf.mxu0
    %341 = vdwg.mxu0
    %v342 = vld [vmem:[#allocation2] sm:$0xff]
    %v343 = vld [vmem:[#allocation2 + $0x8] sm:$0xff]
    %vm344 = vcmask 130048
    %v346 = vsel %vm344, %v342, 0
    %v349 = vsel %vm344, %v343, 0
    %351 = vmatprep.subr.mxu0 0.0
    %352 = vmatpush1.msra.mxu0 0.0
    %353 = vmatprep.subr.mxu0 0.0
    %354 = vmatpush1.msra.mxu0 0.0
    %355 = vmatprep.subr.mxu0 0.0
    %356 = vmatpush1.msra.mxu0 0.0
    %357 = vmatprep.subr.mxu0 0.0
    %358 = vmatpush1.msra.mxu0 0.0
    %359 = vmatprep.subr.mxu0 0.0
    %360 = vmatpush1.msra.mxu0 0.0
    %361 = vmatprep.subr.mxu0 0.0
    %362 = vmatpush1.msra.mxu0 0.0
    %363 = vmatprep.subr.mxu0 0.0
    %364 = vmatpush1.msra.mxu0 0.0
    %365 = vmatprep.subr.mxu0 0.0
    %366 = vmatpush1.msra.mxu0 0.0
    %367 = vmatprep.subr.mxu0 0.0
    %368 = vmatpush1.msra.mxu0 0.0
    %369 = vmatprep.subr.mxu0 0.0
    %370 = vmatpush1.msra.mxu0 0.0
    %371 = vmatprep.subr.mxu0 0.0
    %372 = vmatpush1.msra.mxu0 0.0
    %373 = vmatprep.subr.mxu0 0.0
    %374 = vmatpush1.msra.mxu0 0.0
    %375 = vmatprep.subr.mxu0 0.0
    %376 = vmatpush1.msra.mxu0 0.0
    %377 = vmatprep.subr.mxu0 0.0
    %378 = vmatpush1.msra.mxu0 0.0
    %379 = vmatprep.subr.mxu0 0.0
    %380 = vmatpush1.msra.mxu0 %v339
    %381 = vmatprep.subr.mxu0 0.0
    %382 = vmatpush1.msra.mxu0 %v334
    %383 = vmatprep.subr.mxu0 0.0
    %384 = vmatpush2.msra.mxu0 0.0
    %385 = vmatprep.subr.mxu0 0.0
    %386 = vmatpush2.msra.mxu0 0.0
    %387 = vmatprep.subr.mxu0 0.0
    %388 = vmatpush2.msra.mxu0 0.0
    %389 = vmatprep.subr.mxu0 0.0
    %390 = vmatpush2.msra.mxu0 0.0
    %391 = vmatprep.subr.mxu0 0.0
    %392 = vmatpush2.msra.mxu0 0.0
    %393 = vmatprep.subr.mxu0 0.0
    %394 = vmatpush2.msra.mxu0 0.0
    %395 = vmatprep.subr.mxu0 0.0
    %396 = vmatpush2.msra.mxu0 0.0
    %397 = vmatprep.subr.mxu0 0.0
    %398 = vmatpush2.msra.mxu0 0.0
    %399 = vmatprep.subr.mxu0 0.0
    %400 = vmatpush2.msra.mxu0 0.0
    %401 = vmatprep.subr.mxu0 0.0
    %402 = vmatpush2.msra.mxu0 0.0
    %403 = vmatprep.subr.mxu0 0.0
    %404 = vmatpush2.msra.mxu0 0.0
    %405 = vmatprep.subr.mxu0 0.0
    %406 = vmatpush2.msra.mxu0 0.0
    %407 = vmatprep.subr.mxu0 0.0
    %408 = vmatpush2.msra.mxu0 0.0
    %409 = vmatprep.subr.mxu0 0.0
    %410 = vmatpush2.msra.mxu0 0.0
    %411 = vmatprep.subr.mxu0 0.0
    %412 = vmatpush2.msra.mxu0 0.0
    %413 = vmatprep.subr.mxu0 0.0
    %414 = vmatpush2.msra.mxu0 0.0
    %415 = vmatprep.mubr.f32.mxu0 0.0
    %416 = vmatmul.mubr.f32.gmra.mxu0 %v346
    %v417 = vpop.f32.mrf.mxu0
    %v418 = vadd.f32 0.0, %v417
    %v419 = vpop.f32.mrf.mxu0
    %420 = vmatprep.mubr.f32.mxu0 0.0
    %421 = vmatmul.mubr.f32.gmra.mxu0 %v349
    %v422 = vpop.f32.mrf.mxu0
    %v423 = vadd.f32 0.0, %v422
    %v424 = vpop.f32.mrf.mxu0
    %425 = vdwg.mxu0
    %v426 = vadd.f32 %v255, %v418
    %v427 = vadd.f32 %v260, %v423
    %s428 = scalar_lea.vmem [#allocation7], 32
    %v429 = vld [vmem:[%s428] sm:$0xff]
    %v430 = vld [vmem:[%s428 + $0x8] sm:$0xff]
    %v431 = vld [vmem:[%s428 + $0x10] sm:$0xff]
    %v432 = vld [vmem:[%s428 + $0x18] sm:$0xff]
    %433 = vmatprep.subr.mxu0 0.0
    %434 = vmatpush1.msra.mxu0 0.0
    %435 = vmatprep.subr.mxu0 0.0
    %436 = vmatpush1.msra.mxu0 0.0
    %437 = vmatprep.subr.mxu0 0.0
    %438 = vmatpush1.msra.mxu0 0.0
    %439 = vmatprep.subr.mxu0 0.0
    %440 = vmatpush1.msra.mxu0 0.0
    %441 = vmatprep.subr.mxu0 0.0
    %442 = vmatpush1.msra.mxu0 0.0
    %443 = vmatprep.subr.mxu0 0.0
    %444 = vmatpush1.msra.mxu0 0.0
    %445 = vmatprep.subr.mxu0 0.0
    %446 = vmatpush1.msra.mxu0 0.0
    %447 = vmatprep.subr.mxu0 0.0
    %448 = vmatpush1.msra.mxu0 0.0
    %449 = vmatprep.subr.mxu0 0.0
    %450 = vmatpush1.msra.mxu0 0.0
    %451 = vmatprep.subr.mxu0 0.0
    %452 = vmatpush1.msra.mxu0 0.0
    %453 = vmatprep.subr.mxu0 0.0
    %454 = vmatpush1.msra.mxu0 0.0
    %455 = vmatprep.subr.mxu0 0.0
    %456 = vmatpush1.msra.mxu0 0.0
    %457 = vmatprep.subr.mxu0 0.0
    %458 = vmatpush1.msra.mxu0 %v432
    %459 = vmatprep.subr.mxu0 0.0
    %460 = vmatpush1.msra.mxu0 %v431
    %461 = vmatprep.subr.mxu0 0.0
    %462 = vmatpush1.msra.mxu0 %v430
    %463 = vmatprep.subr.mxu0 0.0
    %464 = vmatpush1.msra.mxu0 %v429
    %465 = vmatprep.subr.mxu0 0.0
    %466 = vmatpush2.msra.mxu0 0.0
    %467 = vmatprep.subr.mxu0 0.0
    %468 = vmatpush2.msra.mxu0 0.0
    %469 = vmatprep.subr.mxu0 0.0
    %470 = vmatpush2.msra.mxu0 0.0
    %471 = vmatprep.subr.mxu0 0.0
    %472 = vmatpush2.msra.mxu0 0.0
    %473 = vmatprep.subr.mxu0 0.0
    %474 = vmatpush2.msra.mxu0 0.0
    %475 = vmatprep.subr.mxu0 0.0
    %476 = vmatpush2.msra.mxu0 0.0
    %477 = vmatprep.subr.mxu0 0.0
    %478 = vmatpush2.msra.mxu0 0.0
    %479 = vmatprep.subr.mxu0 0.0
    %480 = vmatpush2.msra.mxu0 0.0
    %481 = vmatprep.subr.mxu0 0.0
    %482 = vmatpush2.msra.mxu0 0.0
    %483 = vmatprep.subr.mxu0 0.0
    %484 = vmatpush2.msra.mxu0 0.0
    %485 = vmatprep.subr.mxu0 0.0
    %486 = vmatpush2.msra.mxu0 0.0
    %487 = vmatprep.subr.mxu0 0.0
    %488 = vmatpush2.msra.mxu0 0.0
    %489 = vmatprep.subr.mxu0 0.0
    %490 = vmatpush2.msra.mxu0 0.0
    %491 = vmatprep.subr.mxu0 0.0
    %492 = vmatpush2.msra.mxu0 0.0
    %493 = vmatprep.subr.mxu0 0.0
    %494 = vmatpush2.msra.mxu0 0.0
    %495 = vmatprep.subr.mxu0 0.0
    %496 = vmatpush2.msra.mxu0 0.0
    %497 = vmatprep.mubr.f32.mxu0 0.0
    %498 = vmatmul.mubr.f32.gmra.mxu0 %v183
    %v499 = vpop.f32.mrf.mxu0
    %v500 = vadd.f32 0.0, %v499
    %v501 = vpop.f32.mrf.mxu0
    %502 = vmatprep.mubr.f32.mxu0 0.0
    %503 = vmatmul.mubr.f32.gmra.mxu0 %v186
    %v504 = vpop.f32.mrf.mxu0
    %v505 = vadd.f32 0.0, %v504
    %v506 = vpop.f32.mrf.mxu0
    %507 = vdwg.mxu0
    %s508 = scalar_lea.vmem [#allocation2], 16
    %v509 = vld [vmem:[%s508] sm:$0xff]
    %v510 = vld [vmem:[%s508 + $0x8] sm:$0xff]
    %v512 = vsel %vm344, %v509, 0
    %v515 = vsel %vm344, %v510, 0
    %517 = vmatprep.subr.mxu0 0.0
    %518 = vmatpush1.msra.mxu0 0.0
    %519 = vmatprep.subr.mxu0 0.0
    %520 = vmatpush1.msra.mxu0 0.0
    %521 = vmatprep.subr.mxu0 0.0
    %522 = vmatpush1.msra.mxu0 0.0
    %523 = vmatprep.subr.mxu0 0.0
    %524 = vmatpush1.msra.mxu0 0.0
    %525 = vmatprep.subr.mxu0 0.0
    %526 = vmatpush1.msra.mxu0 0.0
    %527 = vmatprep.subr.mxu0 0.0
    %528 = vmatpush1.msra.mxu0 0.0
    %529 = vmatprep.subr.mxu0 0.0
    %530 = vmatpush1.msra.mxu0 0.0
    %531 = vmatprep.subr.mxu0 0.0
    %532 = vmatpush1.msra.mxu0 0.0
    %533 = vmatprep.subr.mxu0 0.0
    %534 = vmatpush1.msra.mxu0 0.0
    %535 = vmatprep.subr.mxu0 0.0
    %536 = vmatpush1.msra.mxu0 0.0
    %537 = vmatprep.subr.mxu0 0.0
    %538 = vmatpush1.msra.mxu0 0.0
    %539 = vmatprep.subr.mxu0 0.0
    %540 = vmatpush1.msra.mxu0 0.0
    %541 = vmatprep.subr.mxu0 0.0
    %542 = vmatpush1.msra.mxu0 0.0
    %543 = vmatprep.subr.mxu0 0.0
    %544 = vmatpush1.msra.mxu0 0.0
    %545 = vmatprep.subr.mxu0 0.0
    %546 = vmatpush1.msra.mxu0 %v505
    %547 = vmatprep.subr.mxu0 0.0
    %548 = vmatpush1.msra.mxu0 %v500
    %549 = vmatprep.subr.mxu0 0.0
    %550 = vmatpush2.msra.mxu0 0.0
    %551 = vmatprep.subr.mxu0 0.0
    %552 = vmatpush2.msra.mxu0 0.0
    %553 = vmatprep.subr.mxu0 0.0
    %554 = vmatpush2.msra.mxu0 0.0
    %555 = vmatprep.subr.mxu0 0.0
    %556 = vmatpush2.msra.mxu0 0.0
    %557 = vmatprep.subr.mxu0 0.0
    %558 = vmatpush2.msra.mxu0 0.0
    %559 = vmatprep.subr.mxu0 0.0
    %560 = vmatpush2.msra.mxu0 0.0
    %561 = vmatprep.subr.mxu0 0.0
    %562 = vmatpush2.msra.mxu0 0.0
    %563 = vmatprep.subr.mxu0 0.0
    %564 = vmatpush2.msra.mxu0 0.0
    %565 = vmatprep.subr.mxu0 0.0
    %566 = vmatpush2.msra.mxu0 0.0
    %567 = vmatprep.subr.mxu0 0.0
    %568 = vmatpush2.msra.mxu0 0.0
    %569 = vmatprep.subr.mxu0 0.0
    %570 = vmatpush2.msra.mxu0 0.0
    %571 = vmatprep.subr.mxu0 0.0
    %572 = vmatpush2.msra.mxu0 0.0
    %573 = vmatprep.subr.mxu0 0.0
    %574 = vmatpush2.msra.mxu0 0.0
    %575 = vmatprep.subr.mxu0 0.0
    %576 = vmatpush2.msra.mxu0 0.0
    %577 = vmatprep.subr.mxu0 0.0
    %578 = vmatpush2.msra.mxu0 0.0
    %579 = vmatprep.subr.mxu0 0.0
    %580 = vmatpush2.msra.mxu0 0.0
    %581 = vmatprep.mubr.f32.mxu0 0.0
    %582 = vmatmul.mubr.f32.gmra.mxu0 %v512
    %v583 = vpop.f32.mrf.mxu0
    %v584 = vadd.f32 0.0, %v583
    %v585 = vpop.f32.mrf.mxu0
    %586 = vmatprep.mubr.f32.mxu0 0.0
    %587 = vmatmul.mubr.f32.gmra.mxu0 %v515
    %v588 = vpop.f32.mrf.mxu0
    %v589 = vadd.f32 0.0, %v588
    %v590 = vpop.f32.mrf.mxu0
    %591 = vdwg.mxu0
    %v592 = vadd.f32 %v426, %v584
    %v593 = vadd.f32 %v427, %v589
    %s594 = scalar_lea.vmem [#allocation7], 64
    %v595 = vld [vmem:[%s594] sm:$0xff]
    %v596 = vld [vmem:[%s594 + $0x8] sm:$0xff]
    %v597 = vld [vmem:[%s594 + $0x10] sm:$0xff]
    %v598 = vld [vmem:[%s594 + $0x18] sm:$0xff]
    %599 = vmatprep.subr.mxu0 0.0
    %600 = vmatpush1.msra.mxu0 0.0
    %601 = vmatprep.subr.mxu0 0.0
    %602 = vmatpush1.msra.mxu0 0.0
    %603 = vmatprep.subr.mxu0 0.0
    %604 = vmatpush1.msra.mxu0 0.0
    %605 = vmatprep.subr.mxu0 0.0
    %606 = vmatpush1.msra.mxu0 0.0
    %607 = vmatprep.subr.mxu0 0.0
    %608 = vmatpush1.msra.mxu0 0.0
    %609 = vmatprep.subr.mxu0 0.0
    %610 = vmatpush1.msra.mxu0 0.0
    %611 = vmatprep.subr.mxu0 0.0
    %612 = vmatpush1.msra.mxu0 0.0
    %613 = vmatprep.subr.mxu0 0.0
    %614 = vmatpush1.msra.mxu0 0.0
    %615 = vmatprep.subr.mxu0 0.0
    %616 = vmatpush1.msra.mxu0 0.0
    %617 = vmatprep.subr.mxu0 0.0
    %618 = vmatpush1.msra.mxu0 0.0
    %619 = vmatprep.subr.mxu0 0.0
    %620 = vmatpush1.msra.mxu0 0.0
    %621 = vmatprep.subr.mxu0 0.0
    %622 = vmatpush1.msra.mxu0 0.0
    %623 = vmatprep.subr.mxu0 0.0
    %624 = vmatpush1.msra.mxu0 %v598
    %625 = vmatprep.subr.mxu0 0.0
    %626 = vmatpush1.msra.mxu0 %v597
    %627 = vmatprep.subr.mxu0 0.0
    %628 = vmatpush1.msra.mxu0 %v596
    %629 = vmatprep.subr.mxu0 0.0
    %630 = vmatpush1.msra.mxu0 %v595
    %631 = vmatprep.subr.mxu0 0.0
    %632 = vmatpush2.msra.mxu0 0.0
    %633 = vmatprep.subr.mxu0 0.0
    %634 = vmatpush2.msra.mxu0 0.0
    %635 = vmatprep.subr.mxu0 0.0
    %636 = vmatpush2.msra.mxu0 0.0
    %637 = vmatprep.subr.mxu0 0.0
    %638 = vmatpush2.msra.mxu0 0.0
    %639 = vmatprep.subr.mxu0 0.0
    %640 = vmatpush2.msra.mxu0 0.0
    %641 = vmatprep.subr.mxu0 0.0
    %642 = vmatpush2.msra.mxu0 0.0
    %643 = vmatprep.subr.mxu0 0.0
    %644 = vmatpush2.msra.mxu0 0.0
    %645 = vmatprep.subr.mxu0 0.0
    %646 = vmatpush2.msra.mxu0 0.0
    %647 = vmatprep.subr.mxu0 0.0
    %648 = vmatpush2.msra.mxu0 0.0
    %649 = vmatprep.subr.mxu0 0.0
    %650 = vmatpush2.msra.mxu0 0.0
    %651 = vmatprep.subr.mxu0 0.0
    %652 = vmatpush2.msra.mxu0 0.0
    %653 = vmatprep.subr.mxu0 0.0
    %654 = vmatpush2.msra.mxu0 0.0
    %655 = vmatprep.subr.mxu0 0.0
    %656 = vmatpush2.msra.mxu0 0.0
    %657 = vmatprep.subr.mxu0 0.0
    %658 = vmatpush2.msra.mxu0 0.0
    %659 = vmatprep.subr.mxu0 0.0
    %660 = vmatpush2.msra.mxu0 0.0
    %661 = vmatprep.subr.mxu0 0.0
    %662 = vmatpush2.msra.mxu0 0.0
    %663 = vmatprep.mubr.f32.mxu0 0.0
    %664 = vmatmul.mubr.f32.gmra.mxu0 %v183
    %v665 = vpop.f32.mrf.mxu0
    %v666 = vadd.f32 0.0, %v665
    %v667 = vpop.f32.mrf.mxu0
    %668 = vmatprep.mubr.f32.mxu0 0.0
    %669 = vmatmul.mubr.f32.gmra.mxu0 %v186
    %v670 = vpop.f32.mrf.mxu0
    %v671 = vadd.f32 0.0, %v670
    %v672 = vpop.f32.mrf.mxu0
    %673 = vdwg.mxu0
    %s674 = scalar_lea.vmem [#allocation2], 32
    %v675 = vld [vmem:[%s674] sm:$0xff]
    %v676 = vld [vmem:[%s674 + $0x8] sm:$0xff]
    %v678 = vsel %vm344, %v675, 0
    %v681 = vsel %vm344, %v676, 0
    %683 = vmatprep.subr.mxu0 0.0
    %684 = vmatpush1.msra.mxu0 0.0
    %685 = vmatprep.subr.mxu0 0.0
    %686 = vmatpush1.msra.mxu0 0.0
    %687 = vmatprep.subr.mxu0 0.0
    %688 = vmatpush1.msra.mxu0 0.0
    %689 = vmatprep.subr.mxu0 0.0
    %690 = vmatpush1.msra.mxu0 0.0
    %691 = vmatprep.subr.mxu0 0.0
    %692 = vmatpush1.msra.mxu0 0.0
    %693 = vmatprep.subr.mxu0 0.0
    %694 = vmatpush1.msra.mxu0 0.0
    %695 = vmatprep.subr.mxu0 0.0
    %696 = vmatpush1.msra.mxu0 0.0
    %697 = vmatprep.subr.mxu0 0.0
    %698 = vmatpush1.msra.mxu0 0.0
    %699 = vmatprep.subr.mxu0 0.0
    %700 = vmatpush1.msra.mxu0 0.0
    %701 = vmatprep.subr.mxu0 0.0
    %702 = vmatpush1.msra.mxu0 0.0
    %703 = vmatprep.subr.mxu0 0.0
    %704 = vmatpush1.msra.mxu0 0.0
    %705 = vmatprep.subr.mxu0 0.0
    %706 = vmatpush1.msra.mxu0 0.0
    %707 = vmatprep.subr.mxu0 0.0
    %708 = vmatpush1.msra.mxu0 0.0
    %709 = vmatprep.subr.mxu0 0.0
    %710 = vmatpush1.msra.mxu0 0.0
    %711 = vmatprep.subr.mxu0 0.0
    %712 = vmatpush1.msra.mxu0 %v671
    %713 = vmatprep.subr.mxu0 0.0
    %714 = vmatpush1.msra.mxu0 %v666
    %715 = vmatprep.subr.mxu0 0.0
    %716 = vmatpush2.msra.mxu0 0.0
    %717 = vmatprep.subr.mxu0 0.0
    %718 = vmatpush2.msra.mxu0 0.0
    %719 = vmatprep.subr.mxu0 0.0
    %720 = vmatpush2.msra.mxu0 0.0
    %721 = vmatprep.subr.mxu0 0.0
    %722 = vmatpush2.msra.mxu0 0.0
    %723 = vmatprep.subr.mxu0 0.0
    %724 = vmatpush2.msra.mxu0 0.0
    %725 = vmatprep.subr.mxu0 0.0
    %726 = vmatpush2.msra.mxu0 0.0
    %727 = vmatprep.subr.mxu0 0.0
    %728 = vmatpush2.msra.mxu0 0.0
    %729 = vmatprep.subr.mxu0 0.0
    %730 = vmatpush2.msra.mxu0 0.0
    %731 = vmatprep.subr.mxu0 0.0
    %732 = vmatpush2.msra.mxu0 0.0
    %733 = vmatprep.subr.mxu0 0.0
    %734 = vmatpush2.msra.mxu0 0.0
    %735 = vmatprep.subr.mxu0 0.0
    %736 = vmatpush2.msra.mxu0 0.0
    %737 = vmatprep.subr.mxu0 0.0
    %738 = vmatpush2.msra.mxu0 0.0
    %739 = vmatprep.subr.mxu0 0.0
    %740 = vmatpush2.msra.mxu0 0.0
    %741 = vmatprep.subr.mxu0 0.0
    %742 = vmatpush2.msra.mxu0 0.0
    %743 = vmatprep.subr.mxu0 0.0
    %744 = vmatpush2.msra.mxu0 0.0
    %745 = vmatprep.subr.mxu0 0.0
    %746 = vmatpush2.msra.mxu0 0.0
    %747 = vmatprep.mubr.f32.mxu0 0.0
    %748 = vmatmul.mubr.f32.gmra.mxu0 %v678
    %v749 = vpop.f32.mrf.mxu0
    %v750 = vadd.f32 0.0, %v749
    %v751 = vpop.f32.mrf.mxu0
    %752 = vmatprep.mubr.f32.mxu0 0.0
    %753 = vmatmul.mubr.f32.gmra.mxu0 %v681
    %v754 = vpop.f32.mrf.mxu0
    %v755 = vadd.f32 0.0, %v754
    %v756 = vpop.f32.mrf.mxu0
    %757 = vdwg.mxu0
    %v758 = vadd.f32 %v592, %v750
    %v759 = vadd.f32 %v593, %v755
    %s760 = scalar_lea.vmem [#allocation7], 96
    %v761 = vld [vmem:[%s760] sm:$0xff]
    %v762 = vld [vmem:[%s760 + $0x8] sm:$0xff]
    %v763 = vld [vmem:[%s760 + $0x10] sm:$0xff]
    %v764 = vld [vmem:[%s760 + $0x18] sm:$0xff]
    %765 = vmatprep.subr.mxu0 0.0
    %766 = vmatpush1.msra.mxu0 0.0
    %767 = vmatprep.subr.mxu0 0.0
    %768 = vmatpush1.msra.mxu0 0.0
    %769 = vmatprep.subr.mxu0 0.0
    %770 = vmatpush1.msra.mxu0 0.0
    %771 = vmatprep.subr.mxu0 0.0
    %772 = vmatpush1.msra.mxu0 0.0
    %773 = vmatprep.subr.mxu0 0.0
    %774 = vmatpush1.msra.mxu0 0.0
    %775 = vmatprep.subr.mxu0 0.0
    %776 = vmatpush1.msra.mxu0 0.0
    %777 = vmatprep.subr.mxu0 0.0
    %778 = vmatpush1.msra.mxu0 0.0
    %779 = vmatprep.subr.mxu0 0.0
    %780 = vmatpush1.msra.mxu0 0.0
    %781 = vmatprep.subr.mxu0 0.0
    %782 = vmatpush1.msra.mxu0 0.0
    %783 = vmatprep.subr.mxu0 0.0
    %784 = vmatpush1.msra.mxu0 0.0
    %785 = vmatprep.subr.mxu0 0.0
    %786 = vmatpush1.msra.mxu0 0.0
    %787 = vmatprep.subr.mxu0 0.0
    %788 = vmatpush1.msra.mxu0 0.0
    %789 = vmatprep.subr.mxu0 0.0
    %790 = vmatpush1.msra.mxu0 %v764
    %791 = vmatprep.subr.mxu0 0.0
    %792 = vmatpush1.msra.mxu0 %v763
    %793 = vmatprep.subr.mxu0 0.0
    %794 = vmatpush1.msra.mxu0 %v762
    %795 = vmatprep.subr.mxu0 0.0
    %796 = vmatpush1.msra.mxu0 %v761
    %797 = vmatprep.subr.mxu0 0.0
    %798 = vmatpush2.msra.mxu0 0.0
    %799 = vmatprep.subr.mxu0 0.0
    %800 = vmatpush2.msra.mxu0 0.0
    %801 = vmatprep.subr.mxu0 0.0
    %802 = vmatpush2.msra.mxu0 0.0
    %803 = vmatprep.subr.mxu0 0.0
    %804 = vmatpush2.msra.mxu0 0.0
    %805 = vmatprep.subr.mxu0 0.0
    %806 = vmatpush2.msra.mxu0 0.0
    %807 = vmatprep.subr.mxu0 0.0
    %808 = vmatpush2.msra.mxu0 0.0
    %809 = vmatprep.subr.mxu0 0.0
    %810 = vmatpush2.msra.mxu0 0.0
    %811 = vmatprep.subr.mxu0 0.0
    %812 = vmatpush2.msra.mxu0 0.0
    %813 = vmatprep.subr.mxu0 0.0
    %814 = vmatpush2.msra.mxu0 0.0
    %815 = vmatprep.subr.mxu0 0.0
    %816 = vmatpush2.msra.mxu0 0.0
    %817 = vmatprep.subr.mxu0 0.0
    %818 = vmatpush2.msra.mxu0 0.0
    %819 = vmatprep.subr.mxu0 0.0
    %820 = vmatpush2.msra.mxu0 0.0
    %821 = vmatprep.subr.mxu0 0.0
    %822 = vmatpush2.msra.mxu0 0.0
    %823 = vmatprep.subr.mxu0 0.0
    %824 = vmatpush2.msra.mxu0 0.0
    %825 = vmatprep.subr.mxu0 0.0
    %826 = vmatpush2.msra.mxu0 0.0
    %827 = vmatprep.subr.mxu0 0.0
    %828 = vmatpush2.msra.mxu0 0.0
    %829 = vmatprep.mubr.f32.mxu0 0.0
    %830 = vmatmul.mubr.f32.gmra.mxu0 %v183
    %v831 = vpop.f32.mrf.mxu0
    %v832 = vadd.f32 0.0, %v831
    %v833 = vpop.f32.mrf.mxu0
    %834 = vmatprep.mubr.f32.mxu0 0.0
    %835 = vmatmul.mubr.f32.gmra.mxu0 %v186
    %v836 = vpop.f32.mrf.mxu0
    %v837 = vadd.f32 0.0, %v836
    %v838 = vpop.f32.mrf.mxu0
    %839 = vdwg.mxu0
    %s840 = scalar_lea.vmem [#allocation2], 48
    %v841 = vld [vmem:[%s840] sm:$0xff]
    %v842 = vld [vmem:[%s840 + $0x8] sm:$0xff]
    %v844 = vsel %vm344, %v841, 0
    %v847 = vsel %vm344, %v842, 0
    %849 = vmatprep.subr.mxu0 0.0
    %850 = vmatpush1.msra.mxu0 0.0
    %851 = vmatprep.subr.mxu0 0.0
    %852 = vmatpush1.msra.mxu0 0.0
    %853 = vmatprep.subr.mxu0 0.0
    %854 = vmatpush1.msra.mxu0 0.0
    %855 = vmatprep.subr.mxu0 0.0
    %856 = vmatpush1.msra.mxu0 0.0
    %857 = vmatprep.subr.mxu0 0.0
    %858 = vmatpush1.msra.mxu0 0.0
    %859 = vmatprep.subr.mxu0 0.0
    %860 = vmatpush1.msra.mxu0 0.0
    %861 = vmatprep.subr.mxu0 0.0
    %862 = vmatpush1.msra.mxu0 0.0
    %863 = vmatprep.subr.mxu0 0.0
    %864 = vmatpush1.msra.mxu0 0.0
    %865 = vmatprep.subr.mxu0 0.0
    %866 = vmatpush1.msra.mxu0 0.0
    %867 = vmatprep.subr.mxu0 0.0
    %868 = vmatpush1.msra.mxu0 0.0
    %869 = vmatprep.subr.mxu0 0.0
    %870 = vmatpush1.msra.mxu0 0.0
    %871 = vmatprep.subr.mxu0 0.0
    %872 = vmatpush1.msra.mxu0 0.0
    %873 = vmatprep.subr.mxu0 0.0
    %874 = vmatpush1.msra.mxu0 0.0
    %875 = vmatprep.subr.mxu0 0.0
    %876 = vmatpush1.msra.mxu0 0.0
    %877 = vmatprep.subr.mxu0 0.0
    %878 = vmatpush1.msra.mxu0 %v837
    %879 = vmatprep.subr.mxu0 0.0
    %880 = vmatpush1.msra.mxu0 %v832
    %881 = vmatprep.subr.mxu0 0.0
    %882 = vmatpush2.msra.mxu0 0.0
    %883 = vmatprep.subr.mxu0 0.0
    %884 = vmatpush2.msra.mxu0 0.0
    %885 = vmatprep.subr.mxu0 0.0
    %886 = vmatpush2.msra.mxu0 0.0
    %887 = vmatprep.subr.mxu0 0.0
    %888 = vmatpush2.msra.mxu0 0.0
    %889 = vmatprep.subr.mxu0 0.0
    %890 = vmatpush2.msra.mxu0 0.0
    %891 = vmatprep.subr.mxu0 0.0
    %892 = vmatpush2.msra.mxu0 0.0
    %893 = vmatprep.subr.mxu0 0.0
    %894 = vmatpush2.msra.mxu0 0.0
    %895 = vmatprep.subr.mxu0 0.0
    %896 = vmatpush2.msra.mxu0 0.0
    %897 = vmatprep.subr.mxu0 0.0
    %898 = vmatpush2.msra.mxu0 0.0
    %899 = vmatprep.subr.mxu0 0.0
    %900 = vmatpush2.msra.mxu0 0.0
    %901 = vmatprep.subr.mxu0 0.0
    %902 = vmatpush2.msra.mxu0 0.0
    %903 = vmatprep.subr.mxu0 0.0
    %904 = vmatpush2.msra.mxu0 0.0
    %905 = vmatprep.subr.mxu0 0.0
    %906 = vmatpush2.msra.mxu0 0.0
    %907 = vmatprep.subr.mxu0 0.0
    %908 = vmatpush2.msra.mxu0 0.0
    %909 = vmatprep.subr.mxu0 0.0
    %910 = vmatpush2.msra.mxu0 0.0
    %911 = vmatprep.subr.mxu0 0.0
    %912 = vmatpush2.msra.mxu0 0.0
    %913 = vmatprep.mubr.f32.mxu0 0.0
    %914 = vmatmul.mubr.f32.gmra.mxu0 %v844
    %v915 = vpop.f32.mrf.mxu0
    %v916 = vadd.f32 0.0, %v915
    %v917 = vpop.f32.mrf.mxu0
    %918 = vmatprep.mubr.f32.mxu0 0.0
    %919 = vmatmul.mubr.f32.gmra.mxu0 %v847
    %v920 = vpop.f32.mrf.mxu0
    %v921 = vadd.f32 0.0, %v920
    %v922 = vpop.f32.mrf.mxu0
    %923 = vdwg.mxu0
    %v924 = vadd.f32 %v758, %v916
    %v925 = vadd.f32 %v759, %v921
    %s926 = scalar_lea.vmem [#allocation7], 128
    %v927 = vld [vmem:[%s926] sm:$0xff]
    %v928 = vld [vmem:[%s926 + $0x8] sm:$0xff]
    %v929 = vld [vmem:[%s926 + $0x10] sm:$0xff]
    %v930 = vld [vmem:[%s926 + $0x18] sm:$0xff]
    %931 = vmatprep.subr.mxu0 0.0
    %932 = vmatpush1.msra.mxu0 0.0
    %933 = vmatprep.subr.mxu0 0.0
    %934 = vmatpush1.msra.mxu0 0.0
    %935 = vmatprep.subr.mxu0 0.0
    %936 = vmatpush1.msra.mxu0 0.0
    %937 = vmatprep.subr.mxu0 0.0
    %938 = vmatpush1.msra.mxu0 0.0
    %939 = vmatprep.subr.mxu0 0.0
    %940 = vmatpush1.msra.mxu0 0.0
    %941 = vmatprep.subr.mxu0 0.0
    %942 = vmatpush1.msra.mxu0 0.0
    %943 = vmatprep.subr.mxu0 0.0
    %944 = vmatpush1.msra.mxu0 0.0
    %945 = vmatprep.subr.mxu0 0.0
    %946 = vmatpush1.msra.mxu0 0.0
    %947 = vmatprep.subr.mxu0 0.0
    %948 = vmatpush1.msra.mxu0 0.0
    %949 = vmatprep.subr.mxu0 0.0
    %950 = vmatpush1.msra.mxu0 0.0
    %951 = vmatprep.subr.mxu0 0.0
    %952 = vmatpush1.msra.mxu0 0.0
    %953 = vmatprep.subr.mxu0 0.0
    %954 = vmatpush1.msra.mxu0 0.0
    %955 = vmatprep.subr.mxu0 0.0
    %956 = vmatpush1.msra.mxu0 %v930
    %957 = vmatprep.subr.mxu0 0.0
    %958 = vmatpush1.msra.mxu0 %v929
    %959 = vmatprep.subr.mxu0 0.0
    %960 = vmatpush1.msra.mxu0 %v928
    %961 = vmatprep.subr.mxu0 0.0
    %962 = vmatpush1.msra.mxu0 %v927
    %963 = vmatprep.subr.mxu0 0.0
    %964 = vmatpush2.msra.mxu0 0.0
    %965 = vmatprep.subr.mxu0 0.0
    %966 = vmatpush2.msra.mxu0 0.0
    %967 = vmatprep.subr.mxu0 0.0
    %968 = vmatpush2.msra.mxu0 0.0
    %969 = vmatprep.subr.mxu0 0.0
    %970 = vmatpush2.msra.mxu0 0.0
    %971 = vmatprep.subr.mxu0 0.0
    %972 = vmatpush2.msra.mxu0 0.0
    %973 = vmatprep.subr.mxu0 0.0
    %974 = vmatpush2.msra.mxu0 0.0
    %975 = vmatprep.subr.mxu0 0.0
    %976 = vmatpush2.msra.mxu0 0.0
    %977 = vmatprep.subr.mxu0 0.0
    %978 = vmatpush2.msra.mxu0 0.0
    %979 = vmatprep.subr.mxu0 0.0
    %980 = vmatpush2.msra.mxu0 0.0
    %981 = vmatprep.subr.mxu0 0.0
    %982 = vmatpush2.msra.mxu0 0.0
    %983 = vmatprep.subr.mxu0 0.0
    %984 = vmatpush2.msra.mxu0 0.0
    %985 = vmatprep.subr.mxu0 0.0
    %986 = vmatpush2.msra.mxu0 0.0
    %987 = vmatprep.subr.mxu0 0.0
    %988 = vmatpush2.msra.mxu0 0.0
    %989 = vmatprep.subr.mxu0 0.0
    %990 = vmatpush2.msra.mxu0 0.0
    %991 = vmatprep.subr.mxu0 0.0
    %992 = vmatpush2.msra.mxu0 0.0
    %993 = vmatprep.subr.mxu0 0.0
    %994 = vmatpush2.msra.mxu0 0.0
    %995 = vmatprep.mubr.f32.mxu0 0.0
    %996 = vmatmul.mubr.f32.gmra.mxu0 %v183
    %v997 = vpop.f32.mrf.mxu0
    %v998 = vadd.f32 0.0, %v997
    %v999 = vpop.f32.mrf.mxu0
    %1000 = vmatprep.mubr.f32.mxu0 0.0
    %1001 = vmatmul.mubr.f32.gmra.mxu0 %v186
    %v1002 = vpop.f32.mrf.mxu0
    %v1003 = vadd.f32 0.0, %v1002
    %v1004 = vpop.f32.mrf.mxu0
    %1005 = vdwg.mxu0
    %s1006 = scalar_lea.vmem [#allocation2], 64
    %v1007 = vld [vmem:[%s1006] sm:$0xff]
    %v1008 = vld [vmem:[%s1006 + $0x8] sm:$0xff]
    %v1010 = vsel %vm344, %v1007, 0
    %v1013 = vsel %vm344, %v1008, 0
    %1015 = vmatprep.subr.mxu0 0.0
    %1016 = vmatpush1.msra.mxu0 0.0
    %1017 = vmatprep.subr.mxu0 0.0
    %1018 = vmatpush1.msra.mxu0 0.0
    %1019 = vmatprep.subr.mxu0 0.0
    %1020 = vmatpush1.msra.mxu0 0.0
    %1021 = vmatprep.subr.mxu0 0.0
    %1022 = vmatpush1.msra.mxu0 0.0
    %1023 = vmatprep.subr.mxu0 0.0
    %1024 = vmatpush1.msra.mxu0 0.0
    %1025 = vmatprep.subr.mxu0 0.0
    %1026 = vmatpush1.msra.mxu0 0.0
    %1027 = vmatprep.subr.mxu0 0.0
    %1028 = vmatpush1.msra.mxu0 0.0
    %1029 = vmatprep.subr.mxu0 0.0
    %1030 = vmatpush1.msra.mxu0 0.0
    %1031 = vmatprep.subr.mxu0 0.0
    %1032 = vmatpush1.msra.mxu0 0.0
    %1033 = vmatprep.subr.mxu0 0.0
    %1034 = vmatpush1.msra.mxu0 0.0
    %1035 = vmatprep.subr.mxu0 0.0
    %1036 = vmatpush1.msra.mxu0 0.0
    %1037 = vmatprep.subr.mxu0 0.0
    %1038 = vmatpush1.msra.mxu0 0.0
    %1039 = vmatprep.subr.mxu0 0.0
    %1040 = vmatpush1.msra.mxu0 0.0
    %1041 = vmatprep.subr.mxu0 0.0
    %1042 = vmatpush1.msra.mxu0 0.0
    %1043 = vmatprep.subr.mxu0 0.0
    %1044 = vmatpush1.msra.mxu0 %v1003
    %1045 = vmatprep.subr.mxu0 0.0
    %1046 = vmatpush1.msra.mxu0 %v998
    %1047 = vmatprep.subr.mxu0 0.0
    %1048 = vmatpush2.msra.mxu0 0.0
    %1049 = vmatprep.subr.mxu0 0.0
    %1050 = vmatpush2.msra.mxu0 0.0
    %1051 = vmatprep.subr.mxu0 0.0
    %1052 = vmatpush2.msra.mxu0 0.0
    %1053 = vmatprep.subr.mxu0 0.0
    %1054 = vmatpush2.msra.mxu0 0.0
    %1055 = vmatprep.subr.mxu0 0.0
    %1056 = vmatpush2.msra.mxu0 0.0
    %1057 = vmatprep.subr.mxu0 0.0
    %1058 = vmatpush2.msra.mxu0 0.0
    %1059 = vmatprep.subr.mxu0 0.0
    %1060 = vmatpush2.msra.mxu0 0.0
    %1061 = vmatprep.subr.mxu0 0.0
    %1062 = vmatpush2.msra.mxu0 0.0
    %1063 = vmatprep.subr.mxu0 0.0
    %1064 = vmatpush2.msra.mxu0 0.0
    %1065 = vmatprep.subr.mxu0 0.0
    %1066 = vmatpush2.msra.mxu0 0.0
    %1067 = vmatprep.subr.mxu0 0.0
    %1068 = vmatpush2.msra.mxu0 0.0
    %1069 = vmatprep.subr.mxu0 0.0
    %1070 = vmatpush2.msra.mxu0 0.0
    %1071 = vmatprep.subr.mxu0 0.0
    %1072 = vmatpush2.msra.mxu0 0.0
    %1073 = vmatprep.subr.mxu0 0.0
    %1074 = vmatpush2.msra.mxu0 0.0
    %1075 = vmatprep.subr.mxu0 0.0
    %1076 = vmatpush2.msra.mxu0 0.0
    %1077 = vmatprep.subr.mxu0 0.0
    %1078 = vmatpush2.msra.mxu0 0.0
    %1079 = vmatprep.mubr.f32.mxu0 0.0
    %1080 = vmatmul.mubr.f32.gmra.mxu0 %v1010
    %v1081 = vpop.f32.mrf.mxu0
    %v1082 = vadd.f32 0.0, %v1081
    %v1083 = vpop.f32.mrf.mxu0
    %1084 = vmatprep.mubr.f32.mxu0 0.0
    %1085 = vmatmul.mubr.f32.gmra.mxu0 %v1013
    %v1086 = vpop.f32.mrf.mxu0
    %v1087 = vadd.f32 0.0, %v1086
    %v1088 = vpop.f32.mrf.mxu0
    %1089 = vdwg.mxu0
    %v1090 = vadd.f32 %v924, %v1082
    %v1091 = vadd.f32 %v925, %v1087
    %s1092 = scalar_lea.vmem [#allocation7], 160
    %v1093 = vld [vmem:[%s1092] sm:$0xff]
    %v1094 = vld [vmem:[%s1092 + $0x8] sm:$0xff]
    %v1095 = vld [vmem:[%s1092 + $0x10] sm:$0xff]
    %v1096 = vld [vmem:[%s1092 + $0x18] sm:$0xff]
    %1097 = vmatprep.subr.mxu0 0.0
    %1098 = vmatpush1.msra.mxu0 0.0
    %1099 = vmatprep.subr.mxu0 0.0
    %1100 = vmatpush1.msra.mxu0 0.0
    %1101 = vmatprep.subr.mxu0 0.0
    %1102 = vmatpush1.msra.mxu0 0.0
    %1103 = vmatprep.subr.mxu0 0.0
    %1104 = vmatpush1.msra.mxu0 0.0
    %1105 = vmatprep.subr.mxu0 0.0
    %1106 = vmatpush1.msra.mxu0 0.0
    %1107 = vmatprep.subr.mxu0 0.0
    %1108 = vmatpush1.msra.mxu0 0.0
    %1109 = vmatprep.subr.mxu0 0.0
    %1110 = vmatpush1.msra.mxu0 0.0
    %1111 = vmatprep.subr.mxu0 0.0
    %1112 = vmatpush1.msra.mxu0 0.0
    %1113 = vmatprep.subr.mxu0 0.0
    %1114 = vmatpush1.msra.mxu0 0.0
    %1115 = vmatprep.subr.mxu0 0.0
    %1116 = vmatpush1.msra.mxu0 0.0
    %1117 = vmatprep.subr.mxu0 0.0
    %1118 = vmatpush1.msra.mxu0 0.0
    %1119 = vmatprep.subr.mxu0 0.0
    %1120 = vmatpush1.msra.mxu0 0.0
    %1121 = vmatprep.subr.mxu0 0.0
    %1122 = vmatpush1.msra.mxu0 %v1096
    %1123 = vmatprep.subr.mxu0 0.0
    %1124 = vmatpush1.msra.mxu0 %v1095
    %1125 = vmatprep.subr.mxu0 0.0
    %1126 = vmatpush1.msra.mxu0 %v1094
    %1127 = vmatprep.subr.mxu0 0.0
    %1128 = vmatpush1.msra.mxu0 %v1093
    %1129 = vmatprep.subr.mxu0 0.0
    %1130 = vmatpush2.msra.mxu0 0.0
    %1131 = vmatprep.subr.mxu0 0.0
    %1132 = vmatpush2.msra.mxu0 0.0
    %1133 = vmatprep.subr.mxu0 0.0
    %1134 = vmatpush2.msra.mxu0 0.0
    %1135 = vmatprep.subr.mxu0 0.0
    %1136 = vmatpush2.msra.mxu0 0.0
    %1137 = vmatprep.subr.mxu0 0.0
    %1138 = vmatpush2.msra.mxu0 0.0
    %1139 = vmatprep.subr.mxu0 0.0
    %1140 = vmatpush2.msra.mxu0 0.0
    %1141 = vmatprep.subr.mxu0 0.0
    %1142 = vmatpush2.msra.mxu0 0.0
    %1143 = vmatprep.subr.mxu0 0.0
    %1144 = vmatpush2.msra.mxu0 0.0
    %1145 = vmatprep.subr.mxu0 0.0
    %1146 = vmatpush2.msra.mxu0 0.0
    %1147 = vmatprep.subr.mxu0 0.0
    %1148 = vmatpush2.msra.mxu0 0.0
    %1149 = vmatprep.subr.mxu0 0.0
    %1150 = vmatpush2.msra.mxu0 0.0
    %1151 = vmatprep.subr.mxu0 0.0
    %1152 = vmatpush2.msra.mxu0 0.0
    %1153 = vmatprep.subr.mxu0 0.0
    %1154 = vmatpush2.msra.mxu0 0.0
    %1155 = vmatprep.subr.mxu0 0.0
    %1156 = vmatpush2.msra.mxu0 0.0
    %1157 = vmatprep.subr.mxu0 0.0
    %1158 = vmatpush2.msra.mxu0 0.0
    %1159 = vmatprep.subr.mxu0 0.0
    %1160 = vmatpush2.msra.mxu0 0.0
    %1161 = vmatprep.mubr.f32.mxu0 0.0
    %1162 = vmatmul.mubr.f32.gmra.mxu0 %v183
    %v1163 = vpop.f32.mrf.mxu0
    %v1164 = vadd.f32 0.0, %v1163
    %v1165 = vpop.f32.mrf.mxu0
    %1166 = vmatprep.mubr.f32.mxu0 0.0
    %1167 = vmatmul.mubr.f32.gmra.mxu0 %v186
    %v1168 = vpop.f32.mrf.mxu0
    %v1169 = vadd.f32 0.0, %v1168
    %v1170 = vpop.f32.mrf.mxu0
    %1171 = vdwg.mxu0
    %s1172 = scalar_lea.vmem [#allocation2], 80
    %v1173 = vld [vmem:[%s1172] sm:$0xff]
    %v1174 = vld [vmem:[%s1172 + $0x8] sm:$0xff]
    %v1176 = vsel %vm344, %v1173, 0
    %v1179 = vsel %vm344, %v1174, 0
    %1181 = vmatprep.subr.mxu0 0.0
    %1182 = vmatpush1.msra.mxu0 0.0
    %1183 = vmatprep.subr.mxu0 0.0
    %1184 = vmatpush1.msra.mxu0 0.0
    %1185 = vmatprep.subr.mxu0 0.0
    %1186 = vmatpush1.msra.mxu0 0.0
    %1187 = vmatprep.subr.mxu0 0.0
    %1188 = vmatpush1.msra.mxu0 0.0
    %1189 = vmatprep.subr.mxu0 0.0
    %1190 = vmatpush1.msra.mxu0 0.0
    %1191 = vmatprep.subr.mxu0 0.0
    %1192 = vmatpush1.msra.mxu0 0.0
    %1193 = vmatprep.subr.mxu0 0.0
    %1194 = vmatpush1.msra.mxu0 0.0
    %1195 = vmatprep.subr.mxu0 0.0
    %1196 = vmatpush1.msra.mxu0 0.0
    %1197 = vmatprep.subr.mxu0 0.0
    %1198 = vmatpush1.msra.mxu0 0.0
    %1199 = vmatprep.subr.mxu0 0.0
    %1200 = vmatpush1.msra.mxu0 0.0
    %1201 = vmatprep.subr.mxu0 0.0
    %1202 = vmatpush1.msra.mxu0 0.0
    %1203 = vmatprep.subr.mxu0 0.0
    %1204 = vmatpush1.msra.mxu0 0.0
    %1205 = vmatprep.subr.mxu0 0.0
    %1206 = vmatpush1.msra.mxu0 0.0
    %1207 = vmatprep.subr.mxu0 0.0
    %1208 = vmatpush1.msra.mxu0 0.0
    %1209 = vmatprep.subr.mxu0 0.0
    %1210 = vmatpush1.msra.mxu0 %v1169
    %1211 = vmatprep.subr.mxu0 0.0
    %1212 = vmatpush1.msra.mxu0 %v1164
    %1213 = vmatprep.subr.mxu0 0.0
    %1214 = vmatpush2.msra.mxu0 0.0
    %1215 = vmatprep.subr.mxu0 0.0
    %1216 = vmatpush2.msra.mxu0 0.0
    %1217 = vmatprep.subr.mxu0 0.0
    %1218 = vmatpush2.msra.mxu0 0.0
    %1219 = vmatprep.subr.mxu0 0.0
    %1220 = vmatpush2.msra.mxu0 0.0
    %1221 = vmatprep.subr.mxu0 0.0
    %1222 = vmatpush2.msra.mxu0 0.0
    %1223 = vmatprep.subr.mxu0 0.0
    %1224 = vmatpush2.msra.mxu0 0.0
    %1225 = vmatprep.subr.mxu0 0.0
    %1226 = vmatpush2.msra.mxu0 0.0
    %1227 = vmatprep.subr.mxu0 0.0
    %1228 = vmatpush2.msra.mxu0 0.0
    %1229 = vmatprep.subr.mxu0 0.0
    %1230 = vmatpush2.msra.mxu0 0.0
    %1231 = vmatprep.subr.mxu0 0.0
    %1232 = vmatpush2.msra.mxu0 0.0
    %1233 = vmatprep.subr.mxu0 0.0
    %1234 = vmatpush2.msra.mxu0 0.0
    %1235 = vmatprep.subr.mxu0 0.0
    %1236 = vmatpush2.msra.mxu0 0.0
    %1237 = vmatprep.subr.mxu0 0.0
    %1238 = vmatpush2.msra.mxu0 0.0
    %1239 = vmatprep.subr.mxu0 0.0
    %1240 = vmatpush2.msra.mxu0 0.0
    %1241 = vmatprep.subr.mxu0 0.0
    %1242 = vmatpush2.msra.mxu0 0.0
    %1243 = vmatprep.subr.mxu0 0.0
    %1244 = vmatpush2.msra.mxu0 0.0
    %1245 = vmatprep.mubr.f32.mxu0 0.0
    %1246 = vmatmul.mubr.f32.gmra.mxu0 %v1176
    %v1247 = vpop.f32.mrf.mxu0
    %v1248 = vadd.f32 0.0, %v1247
    %v1249 = vpop.f32.mrf.mxu0
    %1250 = vmatprep.mubr.f32.mxu0 0.0
    %1251 = vmatmul.mubr.f32.gmra.mxu0 %v1179
    %v1252 = vpop.f32.mrf.mxu0
    %v1253 = vadd.f32 0.0, %v1252
    %v1254 = vpop.f32.mrf.mxu0
    %1255 = vdwg.mxu0
    %v1256 = vadd.f32 %v1090, %v1248
    %v1257 = vadd.f32 %v1091, %v1253
    %s1258 = scalar_lea.vmem [#allocation7], 192
    %v1259 = vld [vmem:[%s1258] sm:$0xff]
    %v1260 = vld [vmem:[%s1258 + $0x8] sm:$0xff]
    %v1261 = vld [vmem:[%s1258 + $0x10] sm:$0xff]
    %v1262 = vld [vmem:[%s1258 + $0x18] sm:$0xff]
    %1263 = vmatprep.subr.mxu0 0.0
    %1264 = vmatpush1.msra.mxu0 0.0
    %1265 = vmatprep.subr.mxu0 0.0
    %1266 = vmatpush1.msra.mxu0 0.0
    %1267 = vmatprep.subr.mxu0 0.0
    %1268 = vmatpush1.msra.mxu0 0.0
    %1269 = vmatprep.subr.mxu0 0.0
    %1270 = vmatpush1.msra.mxu0 0.0
    %1271 = vmatprep.subr.mxu0 0.0
    %1272 = vmatpush1.msra.mxu0 0.0
    %1273 = vmatprep.subr.mxu0 0.0
    %1274 = vmatpush1.msra.mxu0 0.0
    %1275 = vmatprep.subr.mxu0 0.0
    %1276 = vmatpush1.msra.mxu0 0.0
    %1277 = vmatprep.subr.mxu0 0.0
    %1278 = vmatpush1.msra.mxu0 0.0
    %1279 = vmatprep.subr.mxu0 0.0
    %1280 = vmatpush1.msra.mxu0 0.0
    %1281 = vmatprep.subr.mxu0 0.0
    %1282 = vmatpush1.msra.mxu0 0.0
    %1283 = vmatprep.subr.mxu0 0.0
    %1284 = vmatpush1.msra.mxu0 0.0
    %1285 = vmatprep.subr.mxu0 0.0
    %1286 = vmatpush1.msra.mxu0 0.0
    %1287 = vmatprep.subr.mxu0 0.0
    %1288 = vmatpush1.msra.mxu0 %v1262
    %1289 = vmatprep.subr.mxu0 0.0
    %1290 = vmatpush1.msra.mxu0 %v1261
    %1291 = vmatprep.subr.mxu0 0.0
    %1292 = vmatpush1.msra.mxu0 %v1260
    %1293 = vmatprep.subr.mxu0 0.0
    %1294 = vmatpush1.msra.mxu0 %v1259
    %1295 = vmatprep.subr.mxu0 0.0
    %1296 = vmatpush2.msra.mxu0 0.0
    %1297 = vmatprep.subr.mxu0 0.0
    %1298 = vmatpush2.msra.mxu0 0.0
    %1299 = vmatprep.subr.mxu0 0.0
    %1300 = vmatpush2.msra.mxu0 0.0
    %1301 = vmatprep.subr.mxu0 0.0
    %1302 = vmatpush2.msra.mxu0 0.0
    %1303 = vmatprep.subr.mxu0 0.0
    %1304 = vmatpush2.msra.mxu0 0.0
    %1305 = vmatprep.subr.mxu0 0.0
    %1306 = vmatpush2.msra.mxu0 0.0
    %1307 = vmatprep.subr.mxu0 0.0
    %1308 = vmatpush2.msra.mxu0 0.0
    %1309 = vmatprep.subr.mxu0 0.0
    %1310 = vmatpush2.msra.mxu0 0.0
    %1311 = vmatprep.subr.mxu0 0.0
    %1312 = vmatpush2.msra.mxu0 0.0
    %1313 = vmatprep.subr.mxu0 0.0
    %1314 = vmatpush2.msra.mxu0 0.0
    %1315 = vmatprep.subr.mxu0 0.0
    %1316 = vmatpush2.msra.mxu0 0.0
    %1317 = vmatprep.subr.mxu0 0.0
    %1318 = vmatpush2.msra.mxu0 0.0
    %1319 = vmatprep.subr.mxu0 0.0
    %1320 = vmatpush2.msra.mxu0 0.0
    %1321 = vmatprep.subr.mxu0 0.0
    %1322 = vmatpush2.msra.mxu0 0.0
    %1323 = vmatprep.subr.mxu0 0.0
    %1324 = vmatpush2.msra.mxu0 0.0
    %1325 = vmatprep.subr.mxu0 0.0
    %1326 = vmatpush2.msra.mxu0 0.0
    %1327 = vmatprep.mubr.f32.mxu0 0.0
    %1328 = vmatmul.mubr.f32.gmra.mxu0 %v183
    %v1329 = vpop.f32.mrf.mxu0
    %v1330 = vadd.f32 0.0, %v1329
    %v1331 = vpop.f32.mrf.mxu0
    %1332 = vmatprep.mubr.f32.mxu0 0.0
    %1333 = vmatmul.mubr.f32.gmra.mxu0 %v186
    %v1334 = vpop.f32.mrf.mxu0
    %v1335 = vadd.f32 0.0, %v1334
    %v1336 = vpop.f32.mrf.mxu0
    %1337 = vdwg.mxu0
    %s1338 = scalar_lea.vmem [#allocation2], 96
    %v1339 = vld [vmem:[%s1338] sm:$0xff]
    %v1340 = vld [vmem:[%s1338 + $0x8] sm:$0xff]
    %v1342 = vsel %vm344, %v1339, 0
    %v1345 = vsel %vm344, %v1340, 0
    %1347 = vmatprep.subr.mxu0 0.0
    %1348 = vmatpush1.msra.mxu0 0.0
    %1349 = vmatprep.subr.mxu0 0.0
    %1350 = vmatpush1.msra.mxu0 0.0
    %1351 = vmatprep.subr.mxu0 0.0
    %1352 = vmatpush1.msra.mxu0 0.0
    %1353 = vmatprep.subr.mxu0 0.0
    %1354 = vmatpush1.msra.mxu0 0.0
    %1355 = vmatprep.subr.mxu0 0.0
    %1356 = vmatpush1.msra.mxu0 0.0
    %1357 = vmatprep.subr.mxu0 0.0
    %1358 = vmatpush1.msra.mxu0 0.0
    %1359 = vmatprep.subr.mxu0 0.0
    %1360 = vmatpush1.msra.mxu0 0.0
    %1361 = vmatprep.subr.mxu0 0.0
    %1362 = vmatpush1.msra.mxu0 0.0
    %1363 = vmatprep.subr.mxu0 0.0
    %1364 = vmatpush1.msra.mxu0 0.0
    %1365 = vmatprep.subr.mxu0 0.0
    %1366 = vmatpush1.msra.mxu0 0.0
    %1367 = vmatprep.subr.mxu0 0.0
    %1368 = vmatpush1.msra.mxu0 0.0
    %1369 = vmatprep.subr.mxu0 0.0
    %1370 = vmatpush1.msra.mxu0 0.0
    %1371 = vmatprep.subr.mxu0 0.0
    %1372 = vmatpush1.msra.mxu0 0.0
    %1373 = vmatprep.subr.mxu0 0.0
    %1374 = vmatpush1.msra.mxu0 0.0
    %1375 = vmatprep.subr.mxu0 0.0
    %1376 = vmatpush1.msra.mxu0 %v1335
    %1377 = vmatprep.subr.mxu0 0.0
    %1378 = vmatpush1.msra.mxu0 %v1330
    %1379 = vmatprep.subr.mxu0 0.0
    %1380 = vmatpush2.msra.mxu0 0.0
    %1381 = vmatprep.subr.mxu0 0.0
    %1382 = vmatpush2.msra.mxu0 0.0
    %1383 = vmatprep.subr.mxu0 0.0
    %1384 = vmatpush2.msra.mxu0 0.0
    %1385 = vmatprep.subr.mxu0 0.0
    %1386 = vmatpush2.msra.mxu0 0.0
    %1387 = vmatprep.subr.mxu0 0.0
    %1388 = vmatpush2.msra.mxu0 0.0
    %1389 = vmatprep.subr.mxu0 0.0
    %1390 = vmatpush2.msra.mxu0 0.0
    %1391 = vmatprep.subr.mxu0 0.0
    %1392 = vmatpush2.msra.mxu0 0.0
    %1393 = vmatprep.subr.mxu0 0.0
    %1394 = vmatpush2.msra.mxu0 0.0
    %1395 = vmatprep.subr.mxu0 0.0
    %1396 = vmatpush2.msra.mxu0 0.0
    %1397 = vmatprep.subr.mxu0 0.0
    %1398 = vmatpush2.msra.mxu0 0.0
    %1399 = vmatprep.subr.mxu0 0.0
    %1400 = vmatpush2.msra.mxu0 0.0
    %1401 = vmatprep.subr.mxu0 0.0
    %1402 = vmatpush2.msra.mxu0 0.0
    %1403 = vmatprep.subr.mxu0 0.0
    %1404 = vmatpush2.msra.mxu0 0.0
    %1405 = vmatprep.subr.mxu0 0.0
    %1406 = vmatpush2.msra.mxu0 0.0
    %1407 = vmatprep.subr.mxu0 0.0
    %1408 = vmatpush2.msra.mxu0 0.0
    %1409 = vmatprep.subr.mxu0 0.0
    %1410 = vmatpush2.msra.mxu0 0.0
    %1411 = vmatprep.mubr.f32.mxu0 0.0
    %1412 = vmatmul.mubr.f32.gmra.mxu0 %v1342
    %v1413 = vpop.f32.mrf.mxu0
    %v1414 = vadd.f32 0.0, %v1413
    %v1415 = vpop.f32.mrf.mxu0
    %1416 = vmatprep.mubr.f32.mxu0 0.0
    %1417 = vmatmul.mubr.f32.gmra.mxu0 %v1345
    %v1418 = vpop.f32.mrf.mxu0
    %v1419 = vadd.f32 0.0, %v1418
    %v1420 = vpop.f32.mrf.mxu0
    %1421 = vdwg.mxu0
    %v1422 = vadd.f32 %v1256, %v1414
    %v1423 = vadd.f32 %v1257, %v1419
    %s1424 = scalar_lea.vmem [#allocation7], 224
    %v1425 = vld [vmem:[%s1424] sm:$0xff]
    %v1426 = vld [vmem:[%s1424 + $0x8] sm:$0xff]
    %v1427 = vld [vmem:[%s1424 + $0x10] sm:$0xff]
    %v1428 = vld [vmem:[%s1424 + $0x18] sm:$0xff]
    %1429 = vmatprep.subr.mxu0 0.0
    %1430 = vmatpush1.msra.mxu0 0.0
    %1431 = vmatprep.subr.mxu0 0.0
    %1432 = vmatpush1.msra.mxu0 0.0
    %1433 = vmatprep.subr.mxu0 0.0
    %1434 = vmatpush1.msra.mxu0 0.0
    %1435 = vmatprep.subr.mxu0 0.0
    %1436 = vmatpush1.msra.mxu0 0.0
    %1437 = vmatprep.subr.mxu0 0.0
    %1438 = vmatpush1.msra.mxu0 0.0
    %1439 = vmatprep.subr.mxu0 0.0
    %1440 = vmatpush1.msra.mxu0 0.0
    %1441 = vmatprep.subr.mxu0 0.0
    %1442 = vmatpush1.msra.mxu0 0.0
    %1443 = vmatprep.subr.mxu0 0.0
    %1444 = vmatpush1.msra.mxu0 0.0
    %1445 = vmatprep.subr.mxu0 0.0
    %1446 = vmatpush1.msra.mxu0 0.0
    %1447 = vmatprep.subr.mxu0 0.0
    %1448 = vmatpush1.msra.mxu0 0.0
    %1449 = vmatprep.subr.mxu0 0.0
    %1450 = vmatpush1.msra.mxu0 0.0
    %1451 = vmatprep.subr.mxu0 0.0
    %1452 = vmatpush1.msra.mxu0 0.0
    %1453 = vmatprep.subr.mxu0 0.0
    %1454 = vmatpush1.msra.mxu0 %v1428
    %1455 = vmatprep.subr.mxu0 0.0
    %1456 = vmatpush1.msra.mxu0 %v1427
    %1457 = vmatprep.subr.mxu0 0.0
    %1458 = vmatpush1.msra.mxu0 %v1426
    %1459 = vmatprep.subr.mxu0 0.0
    %1460 = vmatpush1.msra.mxu0 %v1425
    %1461 = vmatprep.subr.mxu0 0.0
    %1462 = vmatpush2.msra.mxu0 0.0
    %1463 = vmatprep.subr.mxu0 0.0
    %1464 = vmatpush2.msra.mxu0 0.0
    %1465 = vmatprep.subr.mxu0 0.0
    %1466 = vmatpush2.msra.mxu0 0.0
    %1467 = vmatprep.subr.mxu0 0.0
    %1468 = vmatpush2.msra.mxu0 0.0
    %1469 = vmatprep.subr.mxu0 0.0
    %1470 = vmatpush2.msra.mxu0 0.0
    %1471 = vmatprep.subr.mxu0 0.0
    %1472 = vmatpush2.msra.mxu0 0.0
    %1473 = vmatprep.subr.mxu0 0.0
    %1474 = vmatpush2.msra.mxu0 0.0
    %1475 = vmatprep.subr.mxu0 0.0
    %1476 = vmatpush2.msra.mxu0 0.0
    %1477 = vmatprep.subr.mxu0 0.0
    %1478 = vmatpush2.msra.mxu0 0.0
    %1479 = vmatprep.subr.mxu0 0.0
    %1480 = vmatpush2.msra.mxu0 0.0
    %1481 = vmatprep.subr.mxu0 0.0
    %1482 = vmatpush2.msra.mxu0 0.0
    %1483 = vmatprep.subr.mxu0 0.0
    %1484 = vmatpush2.msra.mxu0 0.0
    %1485 = vmatprep.subr.mxu0 0.0
    %1486 = vmatpush2.msra.mxu0 0.0
    %1487 = vmatprep.subr.mxu0 0.0
    %1488 = vmatpush2.msra.mxu0 0.0
    %1489 = vmatprep.subr.mxu0 0.0
    %1490 = vmatpush2.msra.mxu0 0.0
    %1491 = vmatprep.subr.mxu0 0.0
    %1492 = vmatpush2.msra.mxu0 0.0
    %1493 = vmatprep.mubr.f32.mxu0 0.0
    %1494 = vmatmul.mubr.f32.gmra.mxu0 %v183
    %v1495 = vpop.f32.mrf.mxu0
    %v1496 = vadd.f32 0.0, %v1495
    %v1497 = vpop.f32.mrf.mxu0
    %1498 = vmatprep.mubr.f32.mxu0 0.0
    %1499 = vmatmul.mubr.f32.gmra.mxu0 %v186
    %v1500 = vpop.f32.mrf.mxu0
    %v1501 = vadd.f32 0.0, %v1500
    %v1502 = vpop.f32.mrf.mxu0
    %1503 = vdwg.mxu0
    %s1504 = scalar_lea.vmem [#allocation2], 112
    %v1505 = vld [vmem:[%s1504] sm:$0xff]
    %v1506 = vld [vmem:[%s1504 + $0x8] sm:$0xff]
    %v1508 = vsel %vm344, %v1505, 0
    %v1511 = vsel %vm344, %v1506, 0
    %1513 = vmatprep.subr.mxu0 0.0
    %1514 = vmatpush1.msra.mxu0 0.0
    %1515 = vmatprep.subr.mxu0 0.0
    %1516 = vmatpush1.msra.mxu0 0.0
    %1517 = vmatprep.subr.mxu0 0.0
    %1518 = vmatpush1.msra.mxu0 0.0
    %1519 = vmatprep.subr.mxu0 0.0
    %1520 = vmatpush1.msra.mxu0 0.0
    %1521 = vmatprep.subr.mxu0 0.0
    %1522 = vmatpush1.msra.mxu0 0.0
    %1523 = vmatprep.subr.mxu0 0.0
    %1524 = vmatpush1.msra.mxu0 0.0
    %1525 = vmatprep.subr.mxu0 0.0
    %1526 = vmatpush1.msra.mxu0 0.0
    %1527 = vmatprep.subr.mxu0 0.0
    %1528 = vmatpush1.msra.mxu0 0.0
    %1529 = vmatprep.subr.mxu0 0.0
    %1530 = vmatpush1.msra.mxu0 0.0
    %1531 = vmatprep.subr.mxu0 0.0
    %1532 = vmatpush1.msra.mxu0 0.0
    %1533 = vmatprep.subr.mxu0 0.0
    %1534 = vmatpush1.msra.mxu0 0.0
    %1535 = vmatprep.subr.mxu0 0.0
    %1536 = vmatpush1.msra.mxu0 0.0
    %1537 = vmatprep.subr.mxu0 0.0
    %1538 = vmatpush1.msra.mxu0 0.0
    %1539 = vmatprep.subr.mxu0 0.0
    %1540 = vmatpush1.msra.mxu0 0.0
    %1541 = vmatprep.subr.mxu0 0.0
    %1542 = vmatpush1.msra.mxu0 %v1501
    %1543 = vmatprep.subr.mxu0 0.0
    %1544 = vmatpush1.msra.mxu0 %v1496
    %1545 = vmatprep.subr.mxu0 0.0
    %1546 = vmatpush2.msra.mxu0 0.0
    %1547 = vmatprep.subr.mxu0 0.0
    %1548 = vmatpush2.msra.mxu0 0.0
    %1549 = vmatprep.subr.mxu0 0.0
    %1550 = vmatpush2.msra.mxu0 0.0
    %1551 = vmatprep.subr.mxu0 0.0
    %1552 = vmatpush2.msra.mxu0 0.0
    %1553 = vmatprep.subr.mxu0 0.0
    %1554 = vmatpush2.msra.mxu0 0.0
    %1555 = vmatprep.subr.mxu0 0.0
    %1556 = vmatpush2.msra.mxu0 0.0
    %1557 = vmatprep.subr.mxu0 0.0
    %1558 = vmatpush2.msra.mxu0 0.0
    %1559 = vmatprep.subr.mxu0 0.0
    %1560 = vmatpush2.msra.mxu0 0.0
    %1561 = vmatprep.subr.mxu0 0.0
    %1562 = vmatpush2.msra.mxu0 0.0
    %1563 = vmatprep.subr.mxu0 0.0
    %1564 = vmatpush2.msra.mxu0 0.0
    %1565 = vmatprep.subr.mxu0 0.0
    %1566 = vmatpush2.msra.mxu0 0.0
    %1567 = vmatprep.subr.mxu0 0.0
    %1568 = vmatpush2.msra.mxu0 0.0
    %1569 = vmatprep.subr.mxu0 0.0
    %1570 = vmatpush2.msra.mxu0 0.0
    %1571 = vmatprep.subr.mxu0 0.0
    %1572 = vmatpush2.msra.mxu0 0.0
    %1573 = vmatprep.subr.mxu0 0.0
    %1574 = vmatpush2.msra.mxu0 0.0
    %1575 = vmatprep.subr.mxu0 0.0
    %1576 = vmatpush2.msra.mxu0 0.0
    %1577 = vmatprep.mubr.f32.mxu0 0.0
    %1578 = vmatmul.mubr.f32.gmra.mxu0 %v1508
    %v1579 = vpop.f32.mrf.mxu0
    %v1580 = vadd.f32 0.0, %v1579
    %v1581 = vpop.f32.mrf.mxu0
    %1582 = vmatprep.mubr.f32.mxu0 0.0
    %1583 = vmatmul.mubr.f32.gmra.mxu0 %v1511
    %v1584 = vpop.f32.mrf.mxu0
    %v1585 = vadd.f32 0.0, %v1584
    %v1586 = vpop.f32.mrf.mxu0
    %1587 = vdwg.mxu0
    %v1588 = vadd.f32 %v1422, %v1580
    %v1589 = vadd.f32 %v1423, %v1585
    %v1590 = vld [vmem:[%s6] sm:$0xff]
    %v1591 = vld [vmem:[%s6 + $0x8] sm:$0xff]
    %v1592 = vld [vmem:[%s6 + $0x10] sm:$0xff]
    %v1593 = vld [vmem:[%s6 + $0x18] sm:$0xff]
    %v1594 = vld [vmem:[%s6 + $0x20] sm:$0xff]
    %v1595 = vld [vmem:[%s6 + $0x28] sm:$0xff]
    %v1596 = vld [vmem:[%s6 + $0x30] sm:$0xff]
    %v1597 = vld [vmem:[%s6 + $0x38] sm:$0xff]
    %vm1598 = vcmask 523264
    %v1600 = vsel %vm1598, %v1588, 0
    %v1603 = vsel %vm1598, %v1589, 0
    %1605 = vmatprep.subr.mxu0 0.0
    %1606 = vmatpush1.msra.mxu0 0.0
    %1607 = vmatprep.subr.mxu0 0.0
    %1608 = vmatpush1.msra.mxu0 0.0
    %1609 = vmatprep.subr.mxu0 0.0
    %1610 = vmatpush1.msra.mxu0 0.0
    %1611 = vmatprep.subr.mxu0 0.0
    %1612 = vmatpush1.msra.mxu0 0.0
    %1613 = vmatprep.subr.mxu0 0.0
    %1614 = vmatpush1.msra.mxu0 0.0
    %1615 = vmatprep.subr.mxu0 0.0
    %1616 = vmatpush1.msra.mxu0 0.0
    %1617 = vmatprep.subr.mxu0 0.0
    %1618 = vmatpush1.msra.mxu0 0.0
    %1619 = vmatprep.subr.mxu0 0.0
    %1620 = vmatpush1.msra.mxu0 0.0
    %1621 = vmatprep.subr.mxu0 0.0
    %1622 = vmatpush1.msra.mxu0 %v1597
    %1623 = vmatprep.subr.mxu0 0.0
    %1624 = vmatpush1.msra.mxu0 %v1596
    %1625 = vmatprep.subr.mxu0 0.0
    %1626 = vmatpush1.msra.mxu0 %v1595
    %1627 = vmatprep.subr.mxu0 0.0
    %1628 = vmatpush1.msra.mxu0 %v1594
    %1629 = vmatprep.subr.mxu0 0.0
    %1630 = vmatpush1.msra.mxu0 %v1593
    %1631 = vmatprep.subr.mxu0 0.0
    %1632 = vmatpush1.msra.mxu0 %v1592
    %1633 = vmatprep.subr.mxu0 0.0
    %1634 = vmatpush1.msra.mxu0 %v1591
    %1635 = vmatprep.subr.mxu0 0.0
    %1636 = vmatpush1.msra.mxu0 %v1590
    %1637 = vmatprep.subr.mxu0 0.0
    %1638 = vmatpush2.msra.mxu0 0.0
    %1639 = vmatprep.subr.mxu0 0.0
    %1640 = vmatpush2.msra.mxu0 0.0
    %1641 = vmatprep.subr.mxu0 0.0
    %1642 = vmatpush2.msra.mxu0 0.0
    %1643 = vmatprep.subr.mxu0 0.0
    %1644 = vmatpush2.msra.mxu0 0.0
    %1645 = vmatprep.subr.mxu0 0.0
    %1646 = vmatpush2.msra.mxu0 0.0
    %1647 = vmatprep.subr.mxu0 0.0
    %1648 = vmatpush2.msra.mxu0 0.0
    %1649 = vmatprep.subr.mxu0 0.0
    %1650 = vmatpush2.msra.mxu0 0.0
    %1651 = vmatprep.subr.mxu0 0.0
    %1652 = vmatpush2.msra.mxu0 0.0
    %1653 = vmatprep.subr.mxu0 0.0
    %1654 = vmatpush2.msra.mxu0 0.0
    %1655 = vmatprep.subr.mxu0 0.0
    %1656 = vmatpush2.msra.mxu0 0.0
    %1657 = vmatprep.subr.mxu0 0.0
    %1658 = vmatpush2.msra.mxu0 0.0
    %1659 = vmatprep.subr.mxu0 0.0
    %1660 = vmatpush2.msra.mxu0 0.0
    %1661 = vmatprep.subr.mxu0 0.0
    %1662 = vmatpush2.msra.mxu0 0.0
    %1663 = vmatprep.subr.mxu0 0.0
    %1664 = vmatpush2.msra.mxu0 0.0
    %1665 = vmatprep.subr.mxu0 0.0
    %1666 = vmatpush2.msra.mxu0 0.0
    %1667 = vmatprep.subr.mxu0 0.0
    %1668 = vmatpush2.msra.mxu0 0.0
    %1669 = vmatprep.mubr.f32.mxu0 0.0
    %1670 = vmatmul.mubr.f32.gmra.mxu0 %v1600
    %v1671 = vpop.f32.mrf.mxu0
    %v1672 = vadd.f32 0.0, %v1671
    %v1673 = vpop.f32.mrf.mxu0
    %1674 = vmatprep.mubr.f32.mxu0 0.0
    %1675 = vmatmul.mubr.f32.gmra.mxu0 %v1603
    %v1676 = vpop.f32.mrf.mxu0
    %v1677 = vadd.f32 0.0, %v1676
    %v1678 = vpop.f32.mrf.mxu0
    %1679 = vdwg.mxu0
    %v1680 = vld [vmem:[#allocation5] sm:$0xff]
    %v1681 = vld [vmem:[#allocation5 + $0x8] sm:$0xff]
    %v1682 = vld [vmem:[#allocation11] sm:$0xff]
    %v1683 = vld [vmem:[#allocation11 + $0x8] sm:$0xff]
    %v1684 = vld [vmem:[#allocation11 + $0x10] sm:$0xff]
    %v1685 = vld [vmem:[#allocation11 + $0x18] sm:$0xff]
    %v1686 = vld [vmem:[#allocation11 + $0x20] sm:$0xff]
    %v1687 = vld [vmem:[#allocation11 + $0x28] sm:$0xff]
    %v1688 = vld [vmem:[#allocation11 + $0x30] sm:$0xff]
    %v1689 = vld [vmem:[#allocation11 + $0x38] sm:$0xff]
    %1690 = vmatprep.subr.mxu0 0.0
    %1691 = vmatpush1.msra.mxu0 0.0
    %1692 = vmatprep.subr.mxu0 0.0
    %1693 = vmatpush1.msra.mxu0 0.0
    %1694 = vmatprep.subr.mxu0 0.0
    %1695 = vmatpush1.msra.mxu0 0.0
    %1696 = vmatprep.subr.mxu0 0.0
    %1697 = vmatpush1.msra.mxu0 0.0
    %1698 = vmatprep.subr.mxu0 0.0
    %1699 = vmatpush1.msra.mxu0 0.0
    %1700 = vmatprep.subr.mxu0 0.0
    %1701 = vmatpush1.msra.mxu0 0.0
    %1702 = vmatprep.subr.mxu0 0.0
    %1703 = vmatpush1.msra.mxu0 0.0
    %1704 = vmatprep.subr.mxu0 0.0
    %1705 = vmatpush1.msra.mxu0 0.0
    %1706 = vmatprep.subr.mxu0 0.0
    %1707 = vmatpush1.msra.mxu0 %v1689
    %1708 = vmatprep.subr.mxu0 0.0
    %1709 = vmatpush1.msra.mxu0 %v1688
    %1710 = vmatprep.subr.mxu0 0.0
    %1711 = vmatpush1.msra.mxu0 %v1687
    %1712 = vmatprep.subr.mxu0 0.0
    %1713 = vmatpush1.msra.mxu0 %v1686
    %1714 = vmatprep.subr.mxu0 0.0
    %1715 = vmatpush1.msra.mxu0 %v1685
    %1716 = vmatprep.subr.mxu0 0.0
    %1717 = vmatpush1.msra.mxu0 %v1684
    %1718 = vmatprep.subr.mxu0 0.0
    %1719 = vmatpush1.msra.mxu0 %v1683
    %1720 = vmatprep.subr.mxu0 0.0
    %1721 = vmatpush1.msra.mxu0 %v1682
    %1722 = vmatprep.subr.mxu0 0.0
    %1723 = vmatpush2.msra.mxu0 0.0
    %1724 = vmatprep.subr.mxu0 0.0
    %1725 = vmatpush2.msra.mxu0 0.0
    %1726 = vmatprep.subr.mxu0 0.0
    %1727 = vmatpush2.msra.mxu0 0.0
    %1728 = vmatprep.subr.mxu0 0.0
    %1729 = vmatpush2.msra.mxu0 0.0
    %1730 = vmatprep.subr.mxu0 0.0
    %1731 = vmatpush2.msra.mxu0 0.0
    %1732 = vmatprep.subr.mxu0 0.0
    %1733 = vmatpush2.msra.mxu0 0.0
    %1734 = vmatprep.subr.mxu0 0.0
    %1735 = vmatpush2.msra.mxu0 0.0
    %1736 = vmatprep.subr.mxu0 0.0
    %1737 = vmatpush2.msra.mxu0 0.0
    %1738 = vmatprep.subr.mxu0 0.0
    %1739 = vmatpush2.msra.mxu0 0.0
    %1740 = vmatprep.subr.mxu0 0.0
    %1741 = vmatpush2.msra.mxu0 0.0
    %1742 = vmatprep.subr.mxu0 0.0
    %1743 = vmatpush2.msra.mxu0 0.0
    %1744 = vmatprep.subr.mxu0 0.0
    %1745 = vmatpush2.msra.mxu0 0.0
    %1746 = vmatprep.subr.mxu0 0.0
    %1747 = vmatpush2.msra.mxu0 0.0
    %1748 = vmatprep.subr.mxu0 0.0
    %1749 = vmatpush2.msra.mxu0 0.0
    %1750 = vmatprep.subr.mxu0 0.0
    %1751 = vmatpush2.msra.mxu0 0.0
    %1752 = vmatprep.subr.mxu0 0.0
    %1753 = vmatpush2.msra.mxu0 0.0
    %1754 = vmatprep.mubr.f32.mxu0 0.0
    %1755 = vmatmul.mubr.f32.gmra.mxu0 %v1600
    %v1756 = vpop.f32.mrf.mxu0
    %v1757 = vadd.f32 0.0, %v1756
    %v1758 = vpop.f32.mrf.mxu0
    %1759 = vmatprep.mubr.f32.mxu0 0.0
    %1760 = vmatmul.mubr.f32.gmra.mxu0 %v1603
    %v1761 = vpop.f32.mrf.mxu0
    %v1762 = vadd.f32 0.0, %v1761
    %v1763 = vpop.f32.mrf.mxu0
    %1764 = vdwg.mxu0
    %v1766 = vsel %vm344, %v1680, 0
    %v1769 = vsel %vm344, %v1681, 0
    %1771 = vmatprep.subr.mxu0 0.0
    %1772 = vmatpush1.msra.mxu0 0.0
    %1773 = vmatprep.subr.mxu0 0.0
    %1774 = vmatpush1.msra.mxu0 0.0
    %1775 = vmatprep.subr.mxu0 0.0
    %1776 = vmatpush1.msra.mxu0 0.0
    %1777 = vmatprep.subr.mxu0 0.0
    %1778 = vmatpush1.msra.mxu0 0.0
    %1779 = vmatprep.subr.mxu0 0.0
    %1780 = vmatpush1.msra.mxu0 0.0
    %1781 = vmatprep.subr.mxu0 0.0
    %1782 = vmatpush1.msra.mxu0 0.0
    %1783 = vmatprep.subr.mxu0 0.0
    %1784 = vmatpush1.msra.mxu0 0.0
    %1785 = vmatprep.subr.mxu0 0.0
    %1786 = vmatpush1.msra.mxu0 0.0
    %1787 = vmatprep.subr.mxu0 0.0
    %1788 = vmatpush1.msra.mxu0 0.0
    %1789 = vmatprep.subr.mxu0 0.0
    %1790 = vmatpush1.msra.mxu0 0.0
    %1791 = vmatprep.subr.mxu0 0.0
    %1792 = vmatpush1.msra.mxu0 0.0
    %1793 = vmatprep.subr.mxu0 0.0
    %1794 = vmatpush1.msra.mxu0 0.0
    %1795 = vmatprep.subr.mxu0 0.0
    %1796 = vmatpush1.msra.mxu0 0.0
    %1797 = vmatprep.subr.mxu0 0.0
    %1798 = vmatpush1.msra.mxu0 0.0
    %1799 = vmatprep.subr.mxu0 0.0
    %1800 = vmatpush1.msra.mxu0 %v1677
    %1801 = vmatprep.subr.mxu0 0.0
    %1802 = vmatpush1.msra.mxu0 %v1672
    %1803 = vmatprep.subr.mxu0 0.0
    %1804 = vmatpush2.msra.mxu0 0.0
    %1805 = vmatprep.subr.mxu0 0.0
    %1806 = vmatpush2.msra.mxu0 0.0
    %1807 = vmatprep.subr.mxu0 0.0
    %1808 = vmatpush2.msra.mxu0 0.0
    %1809 = vmatprep.subr.mxu0 0.0
    %1810 = vmatpush2.msra.mxu0 0.0
    %1811 = vmatprep.subr.mxu0 0.0
    %1812 = vmatpush2.msra.mxu0 0.0
    %1813 = vmatprep.subr.mxu0 0.0
    %1814 = vmatpush2.msra.mxu0 0.0
    %1815 = vmatprep.subr.mxu0 0.0
    %1816 = vmatpush2.msra.mxu0 0.0
    %1817 = vmatprep.subr.mxu0 0.0
    %1818 = vmatpush2.msra.mxu0 0.0
    %1819 = vmatprep.subr.mxu0 0.0
    %1820 = vmatpush2.msra.mxu0 0.0
    %1821 = vmatprep.subr.mxu0 0.0
    %1822 = vmatpush2.msra.mxu0 0.0
    %1823 = vmatprep.subr.mxu0 0.0
    %1824 = vmatpush2.msra.mxu0 0.0
    %1825 = vmatprep.subr.mxu0 0.0
    %1826 = vmatpush2.msra.mxu0 0.0
    %1827 = vmatprep.subr.mxu0 0.0
    %1828 = vmatpush2.msra.mxu0 0.0
    %1829 = vmatprep.subr.mxu0 0.0
    %1830 = vmatpush2.msra.mxu0 0.0
    %1831 = vmatprep.subr.mxu0 0.0
    %1832 = vmatpush2.msra.mxu0 0.0
    %1833 = vmatprep.subr.mxu0 0.0
    %1834 = vmatpush2.msra.mxu0 0.0
    %1835 = vmatprep.mubr.f32.mxu0 0.0
    %1836 = vmatmul.mubr.f32.gmra.mxu0 %v1766
    %v1837 = vpop.f32.mrf.mxu0
    %v1838 = vadd.f32 %v1757, %v1837
    %v1839 = vpop.f32.mrf.mxu0
    %1840 = vmatprep.mubr.f32.mxu0 0.0
    %1841 = vmatmul.mubr.f32.gmra.mxu0 %v1769
    %v1842 = vpop.f32.mrf.mxu0
    %v1843 = vadd.f32 %v1762, %v1842
    %v1844 = vpop.f32.mrf.mxu0
    %1845 = vdwg.mxu0
    %v1846 = vld [vmem:[#allocation13] sm:$0x1]
    %v1848 = vlaneseq
    %v1849 = vshrl.u32 %v1848, 7
    %v1850 = vsub.s32 0, %v1849
    %v1851 = vrot.slane %v1846, %v1850
    %v1853 = vadd.f32 %v1838, %v1851
    %v1854 = vadd.f32 %v1843, %v1851
    %1855 = vst.msk [vmem:[#allocation17] sm:$0xff] %vm1598, %v1853
    %1856 = vst.msk [vmem:[#allocation17 + $0x8] sm:$0xff] %vm1598, %v1854
    %v1857 = vld [vmem:[#allocation14] sm:$0xff]
    %v1858 = vld [vmem:[#allocation14 + $0x8] sm:$0xff]
    %v1859 = vld [vmem:[#allocation14 + $0x10] sm:$0xff]
    %v1860 = vld [vmem:[#allocation14 + $0x18] sm:$0xff]
    %v1861 = vld [vmem:[#allocation16] sm:$0xff]
    %v1862 = vld [vmem:[#allocation16 + $0x8] sm:$0xff]
    %v1863 = vld [vmem:[#allocation16 + $0x10] sm:$0xff]
    %v1864 = vld [vmem:[#allocation16 + $0x18] sm:$0xff]
    %v1865 = vld [vmem:[#allocation16 + $0x20] sm:$0xff]
    %v1866 = vld [vmem:[#allocation16 + $0x28] sm:$0xff]
    %v1867 = vld [vmem:[#allocation16 + $0x30] sm:$0xff]
    %v1868 = vld [vmem:[#allocation16 + $0x38] sm:$0xff]
    %v1870 = vsel %vm1598, %v1853, 0
    %v1873 = vsel %vm1598, %v1854, 0
    %1875 = vmatprep.subr.mxu0 0.0
    %1876 = vmatpush1.msra.mxu0 0.0
    %1877 = vmatprep.subr.mxu0 0.0
    %1878 = vmatpush1.msra.mxu0 0.0
    %1879 = vmatprep.subr.mxu0 0.0
    %1880 = vmatpush1.msra.mxu0 0.0
    %1881 = vmatprep.subr.mxu0 0.0
    %1882 = vmatpush1.msra.mxu0 0.0
    %1883 = vmatprep.subr.mxu0 0.0
    %1884 = vmatpush1.msra.mxu0 0.0
    %1885 = vmatprep.subr.mxu0 0.0
    %1886 = vmatpush1.msra.mxu0 0.0
    %1887 = vmatprep.subr.mxu0 0.0
    %1888 = vmatpush1.msra.mxu0 0.0
    %1889 = vmatprep.subr.mxu0 0.0
    %1890 = vmatpush1.msra.mxu0 0.0
    %1891 = vmatprep.subr.mxu0 0.0
    %1892 = vmatpush1.msra.mxu0 %v1868
    %1893 = vmatprep.subr.mxu0 0.0
    %1894 = vmatpush1.msra.mxu0 %v1867
    %1895 = vmatprep.subr.mxu0 0.0
    %1896 = vmatpush1.msra.mxu0 %v1866
    %1897 = vmatprep.subr.mxu0 0.0
    %1898 = vmatpush1.msra.mxu0 %v1865
    %1899 = vmatprep.subr.mxu0 0.0
    %1900 = vmatpush1.msra.mxu0 %v1864
    %1901 = vmatprep.subr.mxu0 0.0
    %1902 = vmatpush1.msra.mxu0 %v1863
    %1903 = vmatprep.subr.mxu0 0.0
    %1904 = vmatpush1.msra.mxu0 %v1862
    %1905 = vmatprep.subr.mxu0 0.0
    %1906 = vmatpush1.msra.mxu0 %v1861
    %1907 = vmatprep.subr.mxu0 0.0
    %1908 = vmatpush2.msra.mxu0 0.0
    %1909 = vmatprep.subr.mxu0 0.0
    %1910 = vmatpush2.msra.mxu0 0.0
    %1911 = vmatprep.subr.mxu0 0.0
    %1912 = vmatpush2.msra.mxu0 0.0
    %1913 = vmatprep.subr.mxu0 0.0
    %1914 = vmatpush2.msra.mxu0 0.0
    %1915 = vmatprep.subr.mxu0 0.0
    %1916 = vmatpush2.msra.mxu0 0.0
    %1917 = vmatprep.subr.mxu0 0.0
    %1918 = vmatpush2.msra.mxu0 0.0
    %1919 = vmatprep.subr.mxu0 0.0
    %1920 = vmatpush2.msra.mxu0 0.0
    %1921 = vmatprep.subr.mxu0 0.0
    %1922 = vmatpush2.msra.mxu0 0.0
    %1923 = vmatprep.subr.mxu0 0.0
    %1924 = vmatpush2.msra.mxu0 0.0
    %1925 = vmatprep.subr.mxu0 0.0
    %1926 = vmatpush2.msra.mxu0 0.0
    %1927 = vmatprep.subr.mxu0 0.0
    %1928 = vmatpush2.msra.mxu0 0.0
    %1929 = vmatprep.subr.mxu0 0.0
    %1930 = vmatpush2.msra.mxu0 0.0
    %1931 = vmatprep.subr.mxu0 0.0
    %1932 = vmatpush2.msra.mxu0 0.0
    %1933 = vmatprep.subr.mxu0 0.0
    %1934 = vmatpush2.msra.mxu0 0.0
    %1935 = vmatprep.subr.mxu0 0.0
    %1936 = vmatpush2.msra.mxu0 0.0
    %1937 = vmatprep.subr.mxu0 0.0
    %1938 = vmatpush2.msra.mxu0 0.0
    %1939 = vmatprep.mubr.f32.mxu0 0.0
    %1940 = vmatmul.mubr.f32.gmra.mxu0 %v1870
    %v1941 = vpop.f32.mrf.mxu0
    %v1942 = vadd.f32 0.0, %v1941
    %v1943 = vpop.f32.mrf.mxu0
    %1944 = vmatprep.mubr.f32.mxu0 0.0
    %1945 = vmatmul.mubr.f32.gmra.mxu0 %v1873
    %v1946 = vpop.f32.mrf.mxu0
    %v1947 = vadd.f32 0.0, %v1946
    %v1948 = vpop.f32.mrf.mxu0
    %1949 = vdwg.mxu0
    %1950 = vmatprep.subr.mxu0 0.0
    %1951 = vmatpush1.msra.mxu0 0.0
    %1952 = vmatprep.subr.mxu0 0.0
    %1953 = vmatpush1.msra.mxu0 0.0
    %1954 = vmatprep.subr.mxu0 0.0
    %1955 = vmatpush1.msra.mxu0 0.0
    %1956 = vmatprep.subr.mxu0 0.0
    %1957 = vmatpush1.msra.mxu0 0.0
    %1958 = vmatprep.subr.mxu0 0.0
    %1959 = vmatpush1.msra.mxu0 0.0
    %1960 = vmatprep.subr.mxu0 0.0
    %1961 = vmatpush1.msra.mxu0 0.0
    %1962 = vmatprep.subr.mxu0 0.0
    %1963 = vmatpush1.msra.mxu0 0.0
    %1964 = vmatprep.subr.mxu0 0.0
    %1965 = vmatpush1.msra.mxu0 0.0
    %1966 = vmatprep.subr.mxu0 0.0
    %1967 = vmatpush1.msra.mxu0 0.0
    %1968 = vmatprep.subr.mxu0 0.0
    %1969 = vmatpush1.msra.mxu0 0.0
    %1970 = vmatprep.subr.mxu0 0.0
    %1971 = vmatpush1.msra.mxu0 0.0
    %1972 = vmatprep.subr.mxu0 0.0
    %1973 = vmatpush1.msra.mxu0 0.0
    %1974 = vmatprep.subr.mxu0 0.0
    %1975 = vmatpush1.msra.mxu0 %v1860
    %1976 = vmatprep.subr.mxu0 0.0
    %1977 = vmatpush1.msra.mxu0 %v1859
    %1978 = vmatprep.subr.mxu0 0.0
    %1979 = vmatpush1.msra.mxu0 %v1858
    %1980 = vmatprep.subr.mxu0 0.0
    %1981 = vmatpush1.msra.mxu0 %v1857
    %1982 = vmatprep.subr.mxu0 0.0
    %1983 = vmatpush2.msra.mxu0 0.0
    %1984 = vmatprep.subr.mxu0 0.0
    %1985 = vmatpush2.msra.mxu0 0.0
    %1986 = vmatprep.subr.mxu0 0.0
    %1987 = vmatpush2.msra.mxu0 0.0
    %1988 = vmatprep.subr.mxu0 0.0
    %1989 = vmatpush2.msra.mxu0 0.0
    %1990 = vmatprep.subr.mxu0 0.0
    %1991 = vmatpush2.msra.mxu0 0.0
    %1992 = vmatprep.subr.mxu0 0.0
    %1993 = vmatpush2.msra.mxu0 0.0
    %1994 = vmatprep.subr.mxu0 0.0
    %1995 = vmatpush2.msra.mxu0 0.0
    %1996 = vmatprep.subr.mxu0 0.0
    %1997 = vmatpush2.msra.mxu0 0.0
    %1998 = vmatprep.subr.mxu0 0.0
    %1999 = vmatpush2.msra.mxu0 0.0
    %2000 = vmatprep.subr.mxu0 0.0
    %2001 = vmatpush2.msra.mxu0 0.0
    %2002 = vmatprep.subr.mxu0 0.0
    %2003 = vmatpush2.msra.mxu0 0.0
    %2004 = vmatprep.subr.mxu0 0.0
    %2005 = vmatpush2.msra.mxu0 0.0
    %2006 = vmatprep.subr.mxu0 0.0
    %2007 = vmatpush2.msra.mxu0 0.0
    %2008 = vmatprep.subr.mxu0 0.0
    %2009 = vmatpush2.msra.mxu0 0.0
    %2010 = vmatprep.subr.mxu0 0.0
    %2011 = vmatpush2.msra.mxu0 0.0
    %2012 = vmatprep.subr.mxu0 0.0
    %2013 = vmatpush2.msra.mxu0 0.0
    %2014 = vmatprep.mubr.f32.mxu0 0.0
    %2015 = vmatmul.mubr.f32.gmra.mxu0 %v183
    %v2016 = vpop.f32.mrf.mxu0
    %v2017 = vadd.f32 %v1942, %v2016
    %v2018 = vpop.f32.mrf.mxu0
    %2019 = vmatprep.mubr.f32.mxu0 0.0
    %2020 = vmatmul.mubr.f32.gmra.mxu0 %v186
    %v2021 = vpop.f32.mrf.mxu0
    %v2022 = vadd.f32 %v1947, %v2021
    %v2023 = vpop.f32.mrf.mxu0
    %2024 = vdwg.mxu0
    %v2025 = vld [vmem:[%s11] sm:$0x1]
    %v2027 = vlaneseq
    %v2028 = vshrl.u32 %v2027, 7
    %v2029 = vsub.s32 0, %v2028
    %v2030 = vrot.slane %v2025, %v2029
    %v2032 = vadd.f32 %v2017, %v2030
    %v2033 = vadd.f32 %v2022, %v2030
    %v2034 = vmax.f32 %v2032, 0.0
    %v2035 = vmax.f32 %v2033, 0.0
    %v2036 = vld [vmem:[%s12] sm:$0xff]
    %v2037 = vld [vmem:[%s12 + $0x8] sm:$0xff]
    %v2038 = vld [vmem:[%s12 + $0x10] sm:$0xff]
    %v2039 = vld [vmem:[%s12 + $0x18] sm:$0xff]
    %v2040 = vld [vmem:[%s12 + $0x20] sm:$0xff]
    %v2041 = vld [vmem:[%s12 + $0x28] sm:$0xff]
    %v2042 = vld [vmem:[%s12 + $0x30] sm:$0xff]
    %v2043 = vld [vmem:[%s12 + $0x38] sm:$0xff]
    %v2044 = vld [vmem:[%s13] sm:$0x1]
    %v2046 = vlaneseq
    %v2047 = vshrl.u32 %v2046, 7
    %v2048 = vsub.s32 0, %v2047
    %v2049 = vrot.slane %v2044, %v2048
    %v2052 = vsel %vm1598, %v2034, 0
    %v2055 = vsel %vm1598, %v2035, 0
    %2057 = vmatprep.subr.mxu0 0.0
    %2058 = vmatpush1.msra.mxu0 0.0
    %2059 = vmatprep.subr.mxu0 0.0
    %2060 = vmatpush1.msra.mxu0 0.0
    %2061 = vmatprep.subr.mxu0 0.0
    %2062 = vmatpush1.msra.mxu0 0.0
    %2063 = vmatprep.subr.mxu0 0.0
    %2064 = vmatpush1.msra.mxu0 0.0
    %2065 = vmatprep.subr.mxu0 0.0
    %2066 = vmatpush1.msra.mxu0 0.0
    %2067 = vmatprep.subr.mxu0 0.0
    %2068 = vmatpush1.msra.mxu0 0.0
    %2069 = vmatprep.subr.mxu0 0.0
    %2070 = vmatpush1.msra.mxu0 0.0
    %2071 = vmatprep.subr.mxu0 0.0
    %2072 = vmatpush1.msra.mxu0 0.0
    %2073 = vmatprep.subr.mxu0 0.0
    %2074 = vmatpush1.msra.mxu0 %v2043
    %2075 = vmatprep.subr.mxu0 0.0
    %2076 = vmatpush1.msra.mxu0 %v2042
    %2077 = vmatprep.subr.mxu0 0.0
    %2078 = vmatpush1.msra.mxu0 %v2041
    %2079 = vmatprep.subr.mxu0 0.0
    %2080 = vmatpush1.msra.mxu0 %v2040
    %2081 = vmatprep.subr.mxu0 0.0
    %2082 = vmatpush1.msra.mxu0 %v2039
    %2083 = vmatprep.subr.mxu0 0.0
    %2084 = vmatpush1.msra.mxu0 %v2038
    %2085 = vmatprep.subr.mxu0 0.0
    %2086 = vmatpush1.msra.mxu0 %v2037
    %2087 = vmatprep.subr.mxu0 0.0
    %2088 = vmatpush1.msra.mxu0 %v2036
    %2089 = vmatprep.subr.mxu0 0.0
    %2090 = vmatpush2.msra.mxu0 0.0
    %2091 = vmatprep.subr.mxu0 0.0
    %2092 = vmatpush2.msra.mxu0 0.0
    %2093 = vmatprep.subr.mxu0 0.0
    %2094 = vmatpush2.msra.mxu0 0.0
    %2095 = vmatprep.subr.mxu0 0.0
    %2096 = vmatpush2.msra.mxu0 0.0
    %2097 = vmatprep.subr.mxu0 0.0
    %2098 = vmatpush2.msra.mxu0 0.0
    %2099 = vmatprep.subr.mxu0 0.0
    %2100 = vmatpush2.msra.mxu0 0.0
    %2101 = vmatprep.subr.mxu0 0.0
    %2102 = vmatpush2.msra.mxu0 0.0
    %2103 = vmatprep.subr.mxu0 0.0
    %2104 = vmatpush2.msra.mxu0 0.0
    %2105 = vmatprep.subr.mxu0 0.0
    %2106 = vmatpush2.msra.mxu0 0.0
    %2107 = vmatprep.subr.mxu0 0.0
    %2108 = vmatpush2.msra.mxu0 0.0
    %2109 = vmatprep.subr.mxu0 0.0
    %2110 = vmatpush2.msra.mxu0 0.0
    %2111 = vmatprep.subr.mxu0 0.0
    %2112 = vmatpush2.msra.mxu0 0.0
    %2113 = vmatprep.subr.mxu0 0.0
    %2114 = vmatpush2.msra.mxu0 0.0
    %2115 = vmatprep.subr.mxu0 0.0
    %2116 = vmatpush2.msra.mxu0 0.0
    %2117 = vmatprep.subr.mxu0 0.0
    %2118 = vmatpush2.msra.mxu0 0.0
    %2119 = vmatprep.subr.mxu0 0.0
    %2120 = vmatpush2.msra.mxu0 0.0
    %2121 = vmatprep.mubr.f32.mxu0 0.0
    %2122 = vmatmul.mubr.f32.gmra.mxu0 %v2052
    %v2123 = vpop.f32.mrf.mxu0
    %v2124 = vadd.f32 %v2049, %v2123
    %v2125 = vpop.f32.mrf.mxu0
    %2126 = vmatprep.mubr.f32.mxu0 0.0
    %2127 = vmatmul.mubr.f32.gmra.mxu0 %v2055
    %v2128 = vpop.f32.mrf.mxu0
    %v2129 = vadd.f32 %v2049, %v2128
    %v2130 = vpop.f32.mrf.mxu0
    %2131 = vdwg.mxu0
    %vm2132 = vcmask 56320
    %v2133 = vsel %vm2132, %v2124, -inf
    %2134 = vmax.xlane.f32.xlu0 %v2133
    %v2135 = vpop.xlane.xlu0 %2134
    %v2136 = vsel %vm2132, %v2129, -inf
    %2137 = vmax.xlane.f32.xlu0 %v2136
    %v2138 = vpop.xlane.xlu0 %2137
    %v2139 = vsub.f32 %v2124, %v2135
    %v2140 = vsub.f32 %v2129, %v2138
    %v2141 = vmul.f32 %v2139, 1.442695
    %v2142 = vpow.pop %v2141
    %v2143 = vmul.f32 %v2140, 1.442695
    %v2144 = vpow.pop %v2143
    %v2145 = vsel %vm2132, %v2142, 0.0
    %2146 = vadd.xlane.f32.xlu0 %v2145
    %v2147 = vpop.xlane.xlu0 %2146
    %v2148 = vsel %vm2132, %v2144, 0.0
    %2149 = vadd.xlane.f32.xlu0 %v2148
    %v2150 = vpop.xlane.xlu0 %2149
    %v2151 = vlog2.pop %v2147
    %v2152 = vmul.f32 %v2151, 0.6931472
    %v2153 = vlog2.pop %v2150
    %v2154 = vmul.f32 %v2153, 0.6931472
    %v2155 = vsub.f32 %v2139, %v2152
    %v2156 = vsub.f32 %v2140, %v2154
    %2157 = vst.msk [vmem:[%s15] sm:$0xff] %vm2132, %v2155
    %2158 = vst.msk [vmem:[%s15 + $0x8] sm:$0xff] %vm2132, %v2156
    // Predicated region
    $region94: #{tpu_custom_call.1} parent=1 // pred_check
      _
    $region95: #{tpu_custom_call.1} parent=1 // pred_check_branch
      %2160 = sbr.rel (0) target = $region97
    $region96: #{tpu_custom_call.1} parent=1 // pred_region
      %s2162 = ssub.s32 256, 256
      %2163 = vsyncadd [#allocation4], %s2162
      %s2164 = sshll.u32 [#allocation17], 4
      %s2165 = int_to_ptr.vmem [resolvable:$true] %s2164
      %2170 = dma.vmem_to_hbm [thread:$0]  %s2165, 256, %s14, [#allocation4], 128, 128, 8
    $region97: #{tpu_custom_call.1} parent=1 // pred_fallthru
      _
    // Predicated region
    $region98: #{tpu_custom_call.1} parent=1 // pred_check
      _
    $region99: #{tpu_custom_call.1} parent=1 // pred_check_branch
      %2172 = sbr.rel (0) target = $region101
    $region100: #{tpu_custom_call.1} parent=1 // pred_region
      _
    $region101: #{tpu_custom_call.1} parent=1 // pred_fallthru
      _
    // Predicated region
    $region102: #{tpu_custom_call.1} parent=1 // pred_check
      _
    $region103: #{tpu_custom_call.1} parent=1 // pred_check_branch
      %2174 = sbr.rel (0) target = $region105
    $region104: #{tpu_custom_call.1} parent=1 // pred_region
      %2175 = dma.done [#allocation4], 256
    $region105: #{tpu_custom_call.1} parent=1 // pred_fallthru
      _
    // Predicated region
    $region106: #{tpu_custom_call.1} parent=1 // pred_check
      _
    $region107: #{tpu_custom_call.1} parent=1 // pred_check_branch
      %2177 = sbr.rel (0) target = $region109
    $region108: #{tpu_custom_call.1} parent=1 // pred_region
      _
    $region109: #{tpu_custom_call.1} parent=1 // pred_fallthru
      _
    %2178 = vsyncpa [#allocation3], 1
    %2179 = vsyncpa [#allocation6], 1
    %2180 = vsyncpa [#allocation9], 1
    %2181 = vsyncpa [#allocation12], 1
    %2182 = vsyncpa [#allocation15], 1
    %2183 = vsyncpa [#allocation4], 1

</llo_original>
